<compile_context>
chip_gen: v7x
topology: tpu7x:2x2x1
jax: 0.10.0
libtpu: 0.0.40
codegen_flags: <defaults>
</compile_context>

<pallas_src>
import jax
import jax.numpy as jnp
from jax import lax
from jax.experimental import pallas as pl
from jax.experimental.pallas import tpu as pltpu

COMMITMENT_COST = 0.25


def _vq_kernel(x_ref, eaug_ref, et_ref, q_ref, hist_ref, sse_ref):
    """One (batch-block, spatial-tile) grid step.

    x_ref:    (Bb, D, T)     input tile, D-major (lanes = spatial)
    eaug_ref: (K, Dp)        [-2*E | |E|^2 | 0-pad]  (resident)
    et_ref:   (D, K)         E^T                      (resident)
    q_ref:    (Bb, D, T)     quantized tile (output, lane-dense)
    hist_ref: (1, 1, K, 1)   per-step codeword histogram (output)
    sse_ref:  (1, 1, 1, 128) per-step sum((q - x)^2), lane-replicated (output)
    """
    Bb, D, T = x_ref.shape
    K, Dp = eaug_ref.shape
    e_aug = eaug_ref[...]                                          # (K, Dp)
    et = et_ref[...]                                               # (D, K)

    # Tail rows of x_aug: one row of ones (pairs with the |e|^2 column of
    # e_aug) plus zero rows padding the contraction dim to a multiple of 8,
    # so the concatenate below joins two sublane-aligned tiles.
    tail = (lax.broadcasted_iota(jnp.int32, (Dp - D, T), 0) == 0).astype(jnp.float32)
    kiota = lax.broadcasted_iota(jnp.int32, (K, T), 0)             # (K, T)

    hist = jnp.zeros((K, 1), jnp.float32)
    sse = jnp.zeros((), jnp.float32)
    for b in range(Bb):  # static unroll; Bb is small (<= 8)
        x = x_ref[b]                                               # (D, T)
        x_aug = jnp.concatenate([x, tail], axis=0)                 # (Dp, T)
        # score = |e|^2 - 2 e.x  (argmin-equivalent to the full distance).
        score = jnp.dot(e_aug, x_aug,
                        preferred_element_type=jnp.float32)        # (K, T) MXU
        min_s = jnp.min(score, axis=0, keepdims=True)              # (1, T)
        # First-occurrence argmin over the codebook axis (matches torch/jnp
        # argmin tie-breaking).  NOTE: an all-NaN column would yield idx == K
        # (one_hot all zero, q = 0) instead of argmin's 0 — edge case only.
        idx = jnp.min(jnp.where(score == min_s, kiota, K),
                      axis=0, keepdims=True)                       # (1, T) int32
        one_hot = (kiota == idx).astype(jnp.float32)               # (K, T)
        # quantized = E^T @ one_hot  (same semantics as encodings @ embedding)
        q = jnp.dot(et, one_hot, preferred_element_type=jnp.float32)  # (D, T)
        q_ref[b] = q

        hist = hist + jnp.sum(one_hot, axis=1, keepdims=True)      # (K, 1)
        d = q - x
        sse = sse + jnp.sum(d * d)

    hist_ref[...] = hist.reshape(1, 1, K, 1)
    sse_ref[...] = jnp.broadcast_to(sse, (1, 1, 1, 128))


def _vmem_capacity_bytes():
    try:
        info = pltpu.get_tpu_info()
        cap = getattr(info, "vmem_capacity_bytes", None)
        if cap:
            return int(cap)
    except Exception:
        pass
    return 64 * 1024 * 1024   # conservative default (v7x per-core VMEM)


def _tile_cap_lanes(vmem_bytes):
    # 8192-lane tiles on 128 MiB VMEM parts (v5e/v6e), 4096 on v7x (64 MiB).
    return 8192 if vmem_bytes >= 96 * 1024 * 1024 else 4096


def _pick_tile_hw(hw, cap):
    if hw % 128 != 0:
        raise ValueError("H*W must be a multiple of 128 for lane-dense tiling")
    if hw <= cap:
        return hw
    for cand in range(cap, 0, -128):
        if hw % cand == 0:
            return cand
    return 128


def vector_quantizer_forward(x_nchw, embedding, *, tile_hw=None, batch_block=None):
    """Forward pass of VectorQuantizer. x_nchw: (B, C, H, W), embedding: (K, D), C == D."""
    B, C, H, W = x_nchw.shape
    K, D = embedding.shape
    assert C == D, "channel dim must equal embedding_dim"
    HW = H * W

    vmem_cap = _vmem_capacity_bytes()
    cap = _tile_cap_lanes(vmem_cap)
    if tile_hw is None:
        tile_hw = _pick_tile_hw(HW, cap)
    assert HW % tile_hw == 0 and tile_hw % 128 == 0
    n_tiles = HW // tile_hw

    # Pack several batch items into one grid step when the whole image fits in
    # a single spatial tile (amortizes per-step overhead for small problems).
    if batch_block is None:
        if n_tiles == 1 and B > 1:
            batch_block = min(B, max(1, cap // tile_hw), 8)
            while B % batch_block:
                batch_block -= 1
        else:
            batch_block = 1
    assert B % batch_block == 0
    gb = B // batch_block

    # D-major view: no transpose, just a (free) reshape of the NCHW buffer.
    x = x_nchw.reshape(B, D, HW).astype(jnp.float32)               # (B, D, HW)
    e = embedding.astype(jnp.float32)                              # (K, D)
    Dp = ((D + 1 + 7) // 8) * 8                                    # D=8 -> 16 (aligned)
    e2 = jnp.sum(e * e, axis=1, keepdims=True)                     # (K, 1)
    e_aug = jnp.concatenate(
        [-2.0 * e, e2, jnp.zeros((K, Dp - D - 1), jnp.float32)], axis=1)  # (K, Dp)
    et = e.T                                                       # (D, K)

    # Rough per-step VMEM footprint ((K,T) intermediates per live batch item +
    # double-buffered x/q tiles); raise the scoped limit only when needed.
    step_bytes = 4 * batch_block * tile_hw * (3 * K + 4 * D)
    cparams = dict(dimension_semantics=("parallel", "parallel"))
    if step_bytes > 12 * (1 << 20):
        cparams["vmem_limit_bytes"] = int(min(vmem_cap * 3 // 4,
                                              2 * step_bytes + (8 << 20)))

    q, hist, sse = pl.pallas_call(
        _vq_kernel,
        out_shape=(
            jax.ShapeDtypeStruct((B, D, HW), jnp.float32),
            jax.ShapeDtypeStruct((gb, n_tiles, K, 1), jnp.float32),
            jax.ShapeDtypeStruct((gb, n_tiles, 1, 128), jnp.float32),
        ),
        grid_spec=pltpu.PrefetchScalarGridSpec(
            num_scalar_prefetch=0,
            grid=(gb, n_tiles),
            in_specs=[
                pl.BlockSpec((batch_block, D, tile_hw), lambda b, t: (b, 0, t)),
                pl.BlockSpec((K, Dp), lambda b, t: (0, 0)),        # [-2E | |E|^2]
                pl.BlockSpec((D, K), lambda b, t: (0, 0)),         # E^T
            ],
            out_specs=[
                pl.BlockSpec((batch_block, D, tile_hw), lambda b, t: (b, 0, t)),
                pl.BlockSpec((1, 1, K, 1), lambda b, t: (b, t, 0, 0)),
                pl.BlockSpec((1, 1, 1, 128), lambda b, t: (b, t, 0, 0)),
            ],
        ),
        compiler_params=pltpu.CompilerParams(**cparams),
    )(x, e_aug, et)

    # Finish the (tiny) stats reductions in XLA from the per-tile partials.
    N = B * HW
    sse_total = jnp.sum(sse[..., 0])
    mse = sse_total / (N * D)
    # e_latent_loss == q_latent_loss numerically in the forward pass (detach
    # only affects gradients), so loss = (1 + COMMITMENT_COST) * mse.
    loss = mse + COMMITMENT_COST * mse

    counts = jnp.sum(hist, axis=(0, 1))[:, 0]                      # (K,)
    avg_probs = counts / N
    perplexity = jnp.exp(-jnp.sum(avg_probs * jnp.log(avg_probs + 1e-10)))

    # straight-through estimator: inputs + (quantized - inputs).detach() == quantized (values)
    # TODO(synk): forward-only; no custom VJP, so gradients of the STE / loss split are not modeled.
    q_nchw = q.reshape(B, D, H, W)
    return q_nchw, loss, perplexity


def _reference_forward(x_nchw, embedding):
    """Pure-JAX reference mirroring the PyTorch module."""
    B, C, H, W = x_nchw.shape
    K, D = embedding.shape
    inputs = jnp.transpose(x_nchw, (0, 2, 3, 1))
    flat = inputs.reshape(-1, D)
    dist = (jnp.sum(flat ** 2, axis=1, keepdims=True)
            + jnp.sum(embedding ** 2, axis=1)
            - 2.0 * flat @ embedding.T)
    idx = jnp.argmin(dist, axis=1)
    enc = jax.nn.one_hot(idx, K, dtype=jnp.float32)
    quant = (enc @ embedding).reshape(inputs.shape)
    mse = jnp.mean((quant - inputs) ** 2)
    loss = mse + COMMITMENT_COST * mse
    avg_probs = jnp.mean(enc, axis=0)
    perplexity = jnp.exp(-jnp.sum(avg_probs * jnp.log(avg_probs + 1e-10)))
    return jnp.transpose(quant, (0, 3, 1, 2)), loss, perplexity


if __name__ == "__main__":
    # Module config: num_embeddings=128, embedding_dim=8; input NCHW = (2, 8, 16, 16).
    num_embeddings = 128
    embedding_dim = 8
    B, H, W = 2, 16, 16

    key = jax.random.PRNGKey(0)
    k_emb, k_x = jax.random.split(key)
    # nn.Embedding weight ~ U(-1/K, 1/K), deterministic here.
    embedding = jax.random.uniform(
        k_emb, (num_embeddings, embedding_dim), dtype=jnp.float32,
        minval=-1.0 / num_embeddings, maxval=1.0 / num_embeddings)
    x = jax.random.normal(k_x, (B, embedding_dim, H, W), dtype=jnp.float32)

    q, loss, perplexity = vector_quantizer_forward(x, embedding)
    jax.block_until_ready((q, loss, perplexity))

    q_ref, loss_ref, ppl_ref = _reference_forward(x, embedding)
    assert q.shape == (B, embedding_dim, H, W)
    assert jnp.allclose(q, q_ref, atol=1e-5, rtol=1e-5)
    assert jnp.allclose(loss, loss_ref, atol=1e-6, rtol=1e-5)
    assert jnp.allclose(perplexity, ppl_ref, atol=1e-4, rtol=1e-4)

    print("KERNEL_OK")
</pallas_src>

<mosaic_0001>
module attributes {stable_mosaic.version = 11 : i64} {
  func.func @_vq_kernel(%arg0: i32, %arg1: i32, %arg2: memref<2x8x256xf32, #tpu.memory_space<vmem>>, %arg3: memref<128x16xf32, #tpu.memory_space<vmem>>, %arg4: memref<8x128xf32, #tpu.memory_space<vmem>>, %arg5: memref<2x8x256xf32, #tpu.memory_space<vmem>>, %arg6: memref<1x1x128x1xf32, #tpu.memory_space<vmem>>, %arg7: memref<1x1x1x128xf32, #tpu.memory_space<vmem>>) attributes {dimension_semantics = [#tpu.dimension_semantics<parallel>, #tpu.dimension_semantics<parallel>], iteration_bounds = array<i64: 1, 1>, scalar_prefetch = 0 : i64, scratch_operands = 0 : i64, tpu.core_type = #tpu.core_type<tc>, window_params = [{transform_indices = @transform_0, window_bounds = array<i64: 2, 8, 256>}, {pipeline_mode = #tpu.pipeline_mode<synchronous>, transform_indices = @transform_1, window_bounds = array<i64: 128, 16>}, {pipeline_mode = #tpu.pipeline_mode<synchronous>, transform_indices = @transform_2, window_bounds = array<i64: 8, 128>}, {transform_indices = @transform_3, window_bounds = array<i64: 2, 8, 256>}, {transform_indices = @transform_4, window_bounds = array<i64: 1, 1, 128, 1>}, {transform_indices = @transform_5, window_bounds = array<i64: 1, 1, 1, 128>}]} {
    %c0 = arith.constant 0 : index
    %c0_0 = arith.constant 0 : index
    %0 = vector.load %arg3[%c0, %c0_0] : memref<128x16xf32, #tpu.memory_space<vmem>>, vector<128x16xf32>
    %c0_1 = arith.constant 0 : index
    %c0_2 = arith.constant 0 : index
    %1 = vector.load %arg4[%c0_1, %c0_2] : memref<8x128xf32, #tpu.memory_space<vmem>>, vector<8x128xf32>
    %2 = tpu.iota {dimensions = array<i32: 0>} : vector<8x256xi32>
    %c0_i32 = arith.constant 0 : i32
    %3 = vector.broadcast %c0_i32 : i32 to vector<8x256xi32>
    %4 = arith.cmpi eq, %2, %3 : vector<8x256xi32>
    %5 = arith.extui %4 : vector<8x256xi1> to vector<8x256xi32>
    %6 = arith.sitofp %5 : vector<8x256xi32> to vector<8x256xf32>
    %7 = tpu.iota {dimensions = array<i32: 0>} : vector<128x256xi32>
    %cst = arith.constant 0.000000e+00 : f32
    %8 = vector.broadcast %cst : f32 to vector<128x1xf32>
    %c0_3 = arith.constant 0 : index
    %c0_4 = arith.constant 0 : index
    %c0_5 = arith.constant 0 : index
    %9 = vector.load %arg2[%c0_3, %c0_4, %c0_5] : memref<2x8x256xf32, #tpu.memory_space<vmem>>, vector<1x8x256xf32>
    %10 = vector.shape_cast %9 : vector<1x8x256xf32> to vector<8x256xf32>
    %11 = tpu.concatenate %10, %6 in 0 : vector<8x256xf32>, vector<8x256xf32> -> vector<16x256xf32>
    %cst_6 = arith.constant dense<0.000000e+00> : vector<128x256xf32>
    %12 = tpu.matmul %0, %11, %cst_6 {dimension_numbers = #tpu.dot_dimension_numbers<[1], [0], [0], [1], [0, 0, 1, 1], [], []>} : vector<128x16xf32>, vector<16x256xf32>, vector<128x256xf32> -> vector<128x256xf32>
    %cst_7 = arith.constant dense<0x7F800000> : vector<256xf32>
    %13 = vector.multi_reduction <minimumf>, %12, %cst_7 [0] : vector<128x256xf32> to vector<256xf32>
    %14 = vector.shape_cast %13 : vector<256xf32> to vector<1x256xf32>
    %15 = vector.broadcast %14 : vector<1x256xf32> to vector<128x256xf32>
    %16 = arith.cmpf oeq, %12, %15 : vector<128x256xf32>
    %c128_i32 = arith.constant 128 : i32
    %17 = vector.broadcast %c128_i32 : i32 to vector<128x256xi32>
    %18 = arith.select %16, %7, %17 : vector<128x256xi1>, vector<128x256xi32>
    %cst_8 = arith.constant dense<2147483647> : vector<256xi32>
    %19 = vector.multi_reduction <minsi>, %18, %cst_8 [0] : vector<128x256xi32> to vector<256xi32>
    %20 = vector.shape_cast %19 : vector<256xi32> to vector<1x256xi32>
    %21 = vector.broadcast %20 : vector<1x256xi32> to vector<128x256xi32>
    %22 = arith.cmpi eq, %7, %21 : vector<128x256xi32>
    %23 = arith.extui %22 : vector<128x256xi1> to vector<128x256xi32>
    %24 = arith.sitofp %23 : vector<128x256xi32> to vector<128x256xf32>
    %cst_9 = arith.constant dense<0.000000e+00> : vector<8x256xf32>
    %25 = tpu.matmul %1, %24, %cst_9 {dimension_numbers = #tpu.dot_dimension_numbers<[1], [0], [0], [1], [0, 0, 1, 1], [], []>} : vector<8x128xf32>, vector<128x256xf32>, vector<8x256xf32> -> vector<8x256xf32>
    %c0_10 = arith.constant 0 : index
    %c0_11 = arith.constant 0 : index
    %c0_12 = arith.constant 0 : index
    %26 = vector.load %arg5[%c0_10, %c0_11, %c0_12] : memref<2x8x256xf32, #tpu.memory_space<vmem>>, vector<1x8x256xf32>
    %27 = vector.shape_cast %26 : vector<1x8x256xf32> to vector<8x256xf32>
    %28 = vector.shape_cast %25 : vector<8x256xf32> to vector<1x8x256xf32>
    tpu.vector_store %arg5[%c0_10, %c0_11, %c0_12], %28 {strides = array<i32>} : memref<2x8x256xf32, #tpu.memory_space<vmem>>, vector<1x8x256xf32>,
    %cst_13 = arith.constant dense<0.000000e+00> : vector<128xf32>
    %29 = vector.multi_reduction <add>, %24, %cst_13 [1] : vector<128x256xf32> to vector<128xf32>
    %30 = vector.shape_cast %29 : vector<128xf32> to vector<128x1xf32>
    %31 = arith.addf %8, %30 : vector<128x1xf32>
    %32 = arith.subf %25, %10 : vector<8x256xf32>
    %33 = arith.mulf %32, %32 : vector<8x256xf32>
    %34 = vector.shape_cast %33 : vector<8x256xf32> to vector<1x8x256xf32>
    %cst_14 = arith.constant dense<0.000000e+00> : vector<1xf32>
    %35 = vector.multi_reduction <add>, %34, %cst_14 [1, 2] : vector<1x8x256xf32> to vector<1xf32>
    %36 = vector.shape_cast %35 : vector<1xf32> to vector<1x1x1xf32>
    %37 = vector.extract %36[0, 0, 0] : f32 from vector<1x1x1xf32>
    %cst_15 = arith.constant 0.000000e+00 : f32
    %38 = arith.addf %cst_15, %37 : f32
    %c1 = arith.constant 1 : index
    %c0_16 = arith.constant 0 : index
    %c0_17 = arith.constant 0 : index
    %39 = vector.load %arg2[%c1, %c0_16, %c0_17] : memref<2x8x256xf32, #tpu.memory_space<vmem>>, vector<1x8x256xf32>
    %40 = vector.shape_cast %39 : vector<1x8x256xf32> to vector<8x256xf32>
    %41 = tpu.concatenate %40, %6 in 0 : vector<8x256xf32>, vector<8x256xf32> -> vector<16x256xf32>
    %cst_18 = arith.constant dense<0.000000e+00> : vector<128x256xf32>
    %42 = tpu.matmul %0, %41, %cst_18 {dimension_numbers = #tpu.dot_dimension_numbers<[1], [0], [0], [1], [0, 0, 1, 1], [], []>} : vector<128x16xf32>, vector<16x256xf32>, vector<128x256xf32> -> vector<128x256xf32>
    %cst_19 = arith.constant dense<0x7F800000> : vector<256xf32>
    %43 = vector.multi_reduction <minimumf>, %42, %cst_19 [0] : vector<128x256xf32> to vector<256xf32>
    %44 = vector.shape_cast %43 : vector<256xf32> to vector<1x256xf32>
    %45 = vector.broadcast %44 : vector<1x256xf32> to vector<128x256xf32>
    %46 = arith.cmpf oeq, %42, %45 : vector<128x256xf32>
    %c128_i32_20 = arith.constant 128 : i32
    %47 = vector.broadcast %c128_i32_20 : i32 to vector<128x256xi32>
    %48 = arith.select %46, %7, %47 : vector<128x256xi1>, vector<128x256xi32>
    %cst_21 = arith.constant dense<2147483647> : vector<256xi32>
    %49 = vector.multi_reduction <minsi>, %48, %cst_21 [0] : vector<128x256xi32> to vector<256xi32>
    %50 = vector.shape_cast %49 : vector<256xi32> to vector<1x256xi32>
    %51 = vector.broadcast %50 : vector<1x256xi32> to vector<128x256xi32>
    %52 = arith.cmpi eq, %7, %51 : vector<128x256xi32>
    %53 = arith.extui %52 : vector<128x256xi1> to vector<128x256xi32>
    %54 = arith.sitofp %53 : vector<128x256xi32> to vector<128x256xf32>
    %cst_22 = arith.constant dense<0.000000e+00> : vector<8x256xf32>
    %55 = tpu.matmul %1, %54, %cst_22 {dimension_numbers = #tpu.dot_dimension_numbers<[1], [0], [0], [1], [0, 0, 1, 1], [], []>} : vector<8x128xf32>, vector<128x256xf32>, vector<8x256xf32> -> vector<8x256xf32>
    %c1_23 = arith.constant 1 : index
    %c0_24 = arith.constant 0 : index
    %c0_25 = arith.constant 0 : index
    %56 = vector.load %arg5[%c1_23, %c0_24, %c0_25] : memref<2x8x256xf32, #tpu.memory_space<vmem>>, vector<1x8x256xf32>
    %57 = vector.shape_cast %56 : vector<1x8x256xf32> to vector<8x256xf32>
    %58 = vector.shape_cast %55 : vector<8x256xf32> to vector<1x8x256xf32>
    tpu.vector_store %arg5[%c1_23, %c0_24, %c0_25], %58 {strides = array<i32>} : memref<2x8x256xf32, #tpu.memory_space<vmem>>, vector<1x8x256xf32>,
    %cst_26 = arith.constant dense<0.000000e+00> : vector<128xf32>
    %59 = vector.multi_reduction <add>, %54, %cst_26 [1] : vector<128x256xf32> to vector<128xf32>
    %60 = vector.shape_cast %59 : vector<128xf32> to vector<128x1xf32>
    %61 = arith.addf %31, %60 : vector<128x1xf32>
    %62 = arith.subf %55, %40 : vector<8x256xf32>
    %63 = arith.mulf %62, %62 : vector<8x256xf32>
    %64 = vector.shape_cast %63 : vector<8x256xf32> to vector<1x8x256xf32>
    %cst_27 = arith.constant dense<0.000000e+00> : vector<1xf32>
    %65 = vector.multi_reduction <add>, %64, %cst_27 [1, 2] : vector<1x8x256xf32> to vector<1xf32>
    %66 = vector.shape_cast %65 : vector<1xf32> to vector<1x1x1xf32>
    %67 = vector.extract %66[0, 0, 0] : f32 from vector<1x1x1xf32>
    %68 = arith.addf %38, %67 : f32
    %69 = vector.shape_cast %61 : vector<128x1xf32> to vector<1x1x128x1xf32>
    %c0_28 = arith.constant 0 : index
    %c0_29 = arith.constant 0 : index
    %c0_30 = arith.constant 0 : index
    %c0_31 = arith.constant 0 : index
    %70 = vector.load %arg6[%c0_28, %c0_29, %c0_30, %c0_31] : memref<1x1x128x1xf32, #tpu.memory_space<vmem>>, vector<1x1x128x1xf32>
    tpu.vector_store %arg6[%c0_28, %c0_29, %c0_30, %c0_31], %69 {strides = array<i32>} : memref<1x1x128x1xf32, #tpu.memory_space<vmem>>, vector<1x1x128x1xf32>,
    %71 = vector.broadcast %68 : f32 to vector<1x1x1x128xf32>
    %c0_32 = arith.constant 0 : index
    %c0_33 = arith.constant 0 : index
    %c0_34 = arith.constant 0 : index
    %c0_35 = arith.constant 0 : index
    %72 = vector.load %arg7[%c0_32, %c0_33, %c0_34, %c0_35] : memref<1x1x1x128xf32, #tpu.memory_space<vmem>>, vector<1x1x1x128xf32>
    tpu.vector_store %arg7[%c0_32, %c0_33, %c0_34, %c0_35], %71 {strides = array<i32>} : memref<1x1x1x128xf32, #tpu.memory_space<vmem>>, vector<1x1x1x128xf32>,
    return
  }
  func.func @transform_0(%arg0: i32, %arg1: i32) -> (i32, i32, i32) {
    %c0_i32 = arith.constant 0 : i32
    %c0_i32_0 = arith.constant 0 : i32
    return %arg0, %c0_i32, %arg1 : i32, i32, i32
  }
  func.func @transform_1(%arg0: i32, %arg1: i32) -> (i32, i32) {
    %c0_i32 = arith.constant 0 : i32
    %c0_i32_0 = arith.constant 0 : i32
    %c0_i32_1 = arith.constant 0 : i32
    return %c0_i32, %c0_i32_0 : i32, i32
  }
  func.func @transform_2(%arg0: i32, %arg1: i32) -> (i32, i32) {
    %c0_i32 = arith.constant 0 : i32
    %c0_i32_0 = arith.constant 0 : i32
    %c0_i32_1 = arith.constant 0 : i32
    return %c0_i32, %c0_i32_0 : i32, i32
  }
  func.func @transform_3(%arg0: i32, %arg1: i32) -> (i32, i32, i32) {
    %c0_i32 = arith.constant 0 : i32
    %c0_i32_0 = arith.constant 0 : i32
    return %arg0, %c0_i32, %arg1 : i32, i32, i32
  }
  func.func @transform_4(%arg0: i32, %arg1: i32) -> (i32, i32, i32, i32) {
    %c0_i32 = arith.constant 0 : i32
    %c0_i32_0 = arith.constant 0 : i32
    %c0_i32_1 = arith.constant 0 : i32
    return %arg0, %arg1, %c0_i32, %c0_i32_0 : i32, i32, i32, i32
  }
  func.func @transform_5(%arg0: i32, %arg1: i32) -> (i32, i32, i32, i32) {
    %c0_i32 = arith.constant 0 : i32
    %c0_i32_0 = arith.constant 0 : i32
    %c0_i32_1 = arith.constant 0 : i32
    return %arg0, %arg1, %c0_i32, %c0_i32_0 : i32, i32, i32, i32
  }
}

</mosaic_0001>

<llo_original>
// kernel: tpu_custom_call.1
$region0: #{tpu_custom_call.1}
  #allocation0 [shape = 'u32[]', space=smem, size = 0x4, offset = 0x4, fixed_abs, tag = 'smem constant byte address 0x4 - core index']
  #allocation1 [shape = 'u32[144,128]{1,0:T(1,128)}', space=vmem, size = 0x12000, scoped, tag = 'internal scratch']
  %s0 = inlined_call_operand.vmem [shape: f32[2,8,256], index: 0, kind: input, shape index: {}]
  %s1 = inlined_call_operand.vmem [shape: f32[128,16], index: 1, kind: input, shape index: {}]
  %s2 = inlined_call_operand.vmem [shape: f32[8,128], index: 2, kind: input, shape index: {}]
  %s3 = inlined_call_operand.hbm [shape: f32[2,8,256], index: 3, kind: output, shape index: {0}]
  %s4 = inlined_call_operand.vmem [shape: f32[1,1,128,1], index: 4, kind: output, shape index: {1}]
  %s5 = inlined_call_operand.hbm [shape: f32[1,1,1,128], index: 5, kind: output, shape index: {2}]
  %6 = xla_tuple %s3, %s4, %s5
  %s7 = sld [smem:[#allocation0]]
  $region38: #{tpu_custom_call.1} parent=0
    _
  %s9 = ssub.s32 1, %s7
  %s10 = scalar_select 0, %s9, %s7
  $region1: #{tpu_custom_call.1} parent=0
    #allocation2 [shape = 'u8[16384]{0}', space=vmem, size = 0x4000, scoped, tag = 'output window, operand 0, single buffered']
    #allocation3 [shape = 's32[1]{0}', space=sflag, size = 0x4, scoped, tag = 'scoped memory for tpu_custom_call.1']
    #allocation4 [shape = 'u8[512]{0}', space=vmem, size = 0x400, scoped, tag = 'output window, operand 2, single buffered']
    #allocation5 [shape = 's32[1]{0}', space=sflag, size = 0x4, scoped, tag = 'scoped memory for tpu_custom_call.1']
    %11 = vsyncpa [#allocation3], 0
    %12 = vsyncpa [#allocation5], 0
    // Predicated region
    $region2: #{tpu_custom_call.1} parent=1 // pred_check
      _
    $region3: #{tpu_custom_call.1} parent=1 // pred_check_branch
      %14 = sbr.rel (0) target = $region5
    $region4: #{tpu_custom_call.1} parent=1 // pred_region
      _
    $region5: #{tpu_custom_call.1} parent=1 // pred_fallthru
      _
    // Predicated region
    $region6: #{tpu_custom_call.1} parent=1 // pred_check
      _
    $region7: #{tpu_custom_call.1} parent=1 // pred_check_branch
      %16 = sbr.rel (0) target = $region9
    $region8: #{tpu_custom_call.1} parent=1 // pred_region
      _
    $region9: #{tpu_custom_call.1} parent=1 // pred_fallthru
      _
    // Predicated region
    $region10: #{tpu_custom_call.1} parent=1 // pred_check
      _
    $region11: #{tpu_custom_call.1} parent=1 // pred_check_branch
      %18 = sbr.rel (0) target = $region13
    $region12: #{tpu_custom_call.1} parent=1 // pred_region
      _
    $region13: #{tpu_custom_call.1} parent=1 // pred_fallthru
      _
    %v19 = vld [vmem:[%s1] sm:$0xff]
    %v20 = vld [vmem:[%s1 + $0x8] sm:$0xff]
    %v21 = vld [vmem:[%s1 + $0x10] sm:$0xff]
    %v22 = vld [vmem:[%s1 + $0x18] sm:$0xff]
    %v23 = vld [vmem:[%s1 + $0x20] sm:$0xff]
    %v24 = vld [vmem:[%s1 + $0x28] sm:$0xff]
    %v25 = vld [vmem:[%s1 + $0x30] sm:$0xff]
    %v26 = vld [vmem:[%s1 + $0x38] sm:$0xff]
    %v27 = vld [vmem:[%s1 + $0x40] sm:$0xff]
    %v28 = vld [vmem:[%s1 + $0x48] sm:$0xff]
    %v29 = vld [vmem:[%s1 + $0x50] sm:$0xff]
    %v30 = vld [vmem:[%s1 + $0x58] sm:$0xff]
    %v31 = vld [vmem:[%s1 + $0x60] sm:$0xff]
    %v32 = vld [vmem:[%s1 + $0x68] sm:$0xff]
    %v33 = vld [vmem:[%s1 + $0x70] sm:$0xff]
    %v34 = vld [vmem:[%s1 + $0x78] sm:$0xff]
    %v35 = vld [vmem:[%s2] sm:$0xff]
    %v36 = vlaneseq
    %v37 = vshrl.u32 %v36, 7
    %vm38 = vcmp.eq.s32.totalorder %v37, 0
    %v39 = vsel %vm38, 1, 0
    %v40 = vcvt.s32.f32 %v39
    %v41 = vadd.s32 %v37, 8
    %v42 = vadd.s32 %v37, 16
    %v43 = vadd.s32 %v37, 24
    %v44 = vadd.s32 %v37, 32
    %v45 = vadd.s32 %v37, 40
    %v46 = vadd.s32 %v37, 48
    %v47 = vadd.s32 %v37, 56
    %v48 = vadd.s32 %v37, 64
    %v49 = vadd.s32 %v37, 72
    %v50 = vadd.s32 %v37, 80
    %v51 = vadd.s32 %v37, 88
    %v52 = vadd.s32 %v37, 96
    %v53 = vadd.s32 %v37, 104
    %v54 = vadd.s32 %v37, 112
    %v55 = vadd.s32 %v37, 120
    %v56 = vld [vmem:[%s0] sm:$0xff]
    %v57 = vld [vmem:[%s0 + $0x8] sm:$0xff]
    %vm58 = vcmask 130048
    %v60 = vsel %vm58, %v19, 0
    %v63 = vsel %vm58, %v20, 0
    %v66 = vsel %vm58, %v21, 0
    %v69 = vsel %vm58, %v22, 0
    %v72 = vsel %vm58, %v23, 0
    %v75 = vsel %vm58, %v24, 0
    %v78 = vsel %vm58, %v25, 0
    %v81 = vsel %vm58, %v26, 0
    %v84 = vsel %vm58, %v27, 0
    %v87 = vsel %vm58, %v28, 0
    %v90 = vsel %vm58, %v29, 0
    %v93 = vsel %vm58, %v30, 0
    %v96 = vsel %vm58, %v31, 0
    %v99 = vsel %vm58, %v32, 0
    %v102 = vsel %vm58, %v33, 0
    %v105 = vsel %vm58, %v34, 0
    %107 = vmatprep.subr.mxu0 %v57
    %108 = vmatpush1.msra.mxu0 %v56
    %109 = vmatprep.subr.mxu0 %v40
    %110 = vmatpush1.msra.mxu0 %v40
    %111 = vmatprep.subr.mxu0 0.0
    %112 = vmatpush1.msra.mxu0 0.0
    %113 = vmatprep.subr.mxu0 0.0
    %114 = vmatpush1.msra.mxu0 0.0
    %115 = vmatprep.subr.mxu0 0.0
    %116 = vmatpush1.msra.mxu0 0.0
    %117 = vmatprep.subr.mxu0 0.0
    %118 = vmatpush1.msra.mxu0 0.0
    %119 = vmatprep.subr.mxu0 0.0
    %120 = vmatpush1.msra.mxu0 0.0
    %121 = vmatprep.subr.mxu0 0.0
    %122 = vmatpush1.msra.mxu0 0.0
    %123 = vmatprep.subr.mxu0 0.0
    %124 = vmatpush1.msra.mxu0 0.0
    %125 = vmatprep.subr.mxu0 0.0
    %126 = vmatpush1.msra.mxu0 0.0
    %127 = vmatprep.subr.mxu0 0.0
    %128 = vmatpush1.msra.mxu0 0.0
    %129 = vmatprep.subr.mxu0 0.0
    %130 = vmatpush1.msra.mxu0 0.0
    %131 = vmatprep.subr.mxu0 0.0
    %132 = vmatpush1.msra.mxu0 0.0
    %133 = vmatprep.subr.mxu0 0.0
    %134 = vmatpush1.msra.mxu0 0.0
    %135 = vmatprep.subr.mxu0 0.0
    %136 = vmatpush1.msra.mxu0 0.0
    %137 = vmatprep.subr.mxu0 0.0
    %138 = vmatpush1.msra.mxu0 0.0
    %139 = vmatprep.subr.mxu0 0.0
    %140 = vmatpush1.msra.mxu0 0.0
    %141 = vmatprep.subr.mxu0 0.0
    %142 = vmatpush1.msra.mxu0 0.0
    %143 = vmatprep.subr.mxu0 0.0
    %144 = vmatpush1.msra.mxu0 0.0
    %145 = vmatprep.subr.mxu0 0.0
    %146 = vmatpush1.msra.mxu0 0.0
    %147 = vmatprep.subr.mxu0 0.0
    %148 = vmatpush1.msra.mxu0 0.0
    %149 = vmatprep.subr.mxu0 0.0
    %150 = vmatpush1.msra.mxu0 0.0
    %151 = vmatprep.subr.mxu0 0.0
    %152 = vmatpush1.msra.mxu0 0.0
    %153 = vmatprep.subr.mxu0 0.0
    %154 = vmatpush1.msra.mxu0 0.0
    %155 = vmatprep.subr.mxu0 0.0
    %156 = vmatpush1.msra.mxu0 0.0
    %157 = vmatprep.subr.mxu0 0.0
    %158 = vmatpush1.msra.mxu0 0.0
    %159 = vmatprep.subr.mxu0 0.0
    %160 = vmatpush1.msra.mxu0 0.0
    %161 = vmatprep.subr.mxu0 0.0
    %162 = vmatpush1.msra.mxu0 0.0
    %163 = vmatprep.subr.mxu0 0.0
    %164 = vmatpush1.msra.mxu0 0.0
    %165 = vmatprep.subr.mxu0 0.0
    %166 = vmatpush1.msra.mxu0 0.0
    %167 = vmatprep.subr.mxu0 0.0
    %168 = vmatpush1.msra.mxu0 0.0
    %169 = vmatprep.subr.mxu0 0.0
    %170 = vmatpush1.msra.mxu0 0.0
    %171 = vmatprep.mubr.f32.mxu0 0.0
    %172 = vmatmul.mubr.f32.gmra.mrb[0].mxu0 %v60
    %v173 = vpop.f32.mrb[0].mxu0
    %v174 = vadd.f32 0.0, %v173
    %v175 = vpop.f32.mrb[0].mxu0
    %v176 = vadd.f32 0.0, %v175
    %177 = vmatprep.mubr.f32.mxu0 0.0
    %178 = vmatmul.mubr.f32.gmra.mrb[0].mxu0 %v63
    %v179 = vpop.f32.mrb[0].mxu0
    %v180 = vadd.f32 0.0, %v179
    %v181 = vpop.f32.mrb[0].mxu0
    %v182 = vadd.f32 0.0, %v181
    %183 = vmatprep.mubr.f32.mxu0 0.0
    %184 = vmatmul.mubr.f32.gmra.mrb[0].mxu0 %v66
    %v185 = vpop.f32.mrb[0].mxu0
    %v186 = vadd.f32 0.0, %v185
    %v187 = vpop.f32.mrb[0].mxu0
    %v188 = vadd.f32 0.0, %v187
    %189 = vmatprep.mubr.f32.mxu0 0.0
    %190 = vmatmul.mubr.f32.gmra.mrb[0].mxu0 %v69
    %v191 = vpop.f32.mrb[0].mxu0
    %v192 = vadd.f32 0.0, %v191
    %v193 = vpop.f32.mrb[0].mxu0
    %v194 = vadd.f32 0.0, %v193
    %195 = vmatprep.mubr.f32.mxu0 0.0
    %196 = vmatmul.mubr.f32.gmra.mrb[0].mxu0 %v72
    %v197 = vpop.f32.mrb[0].mxu0
    %v198 = vadd.f32 0.0, %v197
    %v199 = vpop.f32.mrb[0].mxu0
    %v200 = vadd.f32 0.0, %v199
    %201 = vmatprep.mubr.f32.mxu0 0.0
    %202 = vmatmul.mubr.f32.gmra.mrb[0].mxu0 %v75
    %v203 = vpop.f32.mrb[0].mxu0
    %v204 = vadd.f32 0.0, %v203
    %v205 = vpop.f32.mrb[0].mxu0
    %v206 = vadd.f32 0.0, %v205
    %207 = vmatprep.mubr.f32.mxu0 0.0
    %208 = vmatmul.mubr.f32.gmra.mrb[0].mxu0 %v78
    %v209 = vpop.f32.mrb[0].mxu0
    %v210 = vadd.f32 0.0, %v209
    %v211 = vpop.f32.mrb[0].mxu0
    %v212 = vadd.f32 0.0, %v211
    %213 = vmatprep.mubr.f32.mxu0 0.0
    %214 = vmatmul.mubr.f32.gmra.mrb[0].mxu0 %v81
    %v215 = vpop.f32.mrb[0].mxu0
    %v216 = vadd.f32 0.0, %v215
    %v217 = vpop.f32.mrb[0].mxu0
    %v218 = vadd.f32 0.0, %v217
    %219 = vmatprep.mubr.f32.mxu0 0.0
    %220 = vmatmul.mubr.f32.gmra.mrb[0].mxu0 %v84
    %v221 = vpop.f32.mrb[0].mxu0
    %v222 = vadd.f32 0.0, %v221
    %v223 = vpop.f32.mrb[0].mxu0
    %v224 = vadd.f32 0.0, %v223
    %225 = vmatprep.mubr.f32.mxu0 0.0
    %226 = vmatmul.mubr.f32.gmra.mrb[0].mxu0 %v87
    %v227 = vpop.f32.mrb[0].mxu0
    %v228 = vadd.f32 0.0, %v227
    %v229 = vpop.f32.mrb[0].mxu0
    %v230 = vadd.f32 0.0, %v229
    %231 = vmatprep.mubr.f32.mxu0 0.0
    %232 = vmatmul.mubr.f32.gmra.mrb[0].mxu0 %v90
    %v233 = vpop.f32.mrb[0].mxu0
    %v234 = vadd.f32 0.0, %v233
    %v235 = vpop.f32.mrb[0].mxu0
    %v236 = vadd.f32 0.0, %v235
    %237 = vmatprep.mubr.f32.mxu0 0.0
    %238 = vmatmul.mubr.f32.gmra.mrb[0].mxu0 %v93
    %v239 = vpop.f32.mrb[0].mxu0
    %v240 = vadd.f32 0.0, %v239
    %v241 = vpop.f32.mrb[0].mxu0
    %v242 = vadd.f32 0.0, %v241
    %243 = vmatprep.mubr.f32.mxu0 0.0
    %244 = vmatmul.mubr.f32.gmra.mrb[0].mxu0 %v96
    %v245 = vpop.f32.mrb[0].mxu0
    %v246 = vadd.f32 0.0, %v245
    %v247 = vpop.f32.mrb[0].mxu0
    %v248 = vadd.f32 0.0, %v247
    %249 = vmatprep.mubr.f32.mxu0 0.0
    %250 = vmatmul.mubr.f32.gmra.mrb[0].mxu0 %v99
    %v251 = vpop.f32.mrb[0].mxu0
    %v252 = vadd.f32 0.0, %v251
    %v253 = vpop.f32.mrb[0].mxu0
    %v254 = vadd.f32 0.0, %v253
    %255 = vmatprep.mubr.f32.mxu0 0.0
    %256 = vmatmul.mubr.f32.gmra.mrb[0].mxu0 %v102
    %v257 = vpop.f32.mrb[0].mxu0
    %v258 = vadd.f32 0.0, %v257
    %v259 = vpop.f32.mrb[0].mxu0
    %v260 = vadd.f32 0.0, %v259
    %261 = vmatprep.mubr.f32.mxu0 0.0
    %262 = vmatmul.mubr.f32.gmra.mrb[0].mxu0 %v105
    %v263 = vpop.f32.mrb[0].mxu0
    %v264 = vadd.f32 0.0, %v263
    %v265 = vpop.f32.mrb[0].mxu0
    %v266 = vadd.f32 0.0, %v265
    %267 = vdwg.mxu0
    %v268 = vmin.f32 %v174, %v186
    %v269 = vmin.f32 %v180, %v192
    %v270 = vmin.f32 %v268, %v198
    %v271 = vmin.f32 %v269, %v204
    %v272 = vmin.f32 %v270, %v210
    %v273 = vmin.f32 %v271, %v216
    %v274 = vmin.f32 %v272, %v222
    %v275 = vmin.f32 %v273, %v228
    %v276 = vmin.f32 %v274, %v234
    %v277 = vmin.f32 %v275, %v240
    %v278 = vmin.f32 %v276, %v246
    %v279 = vmin.f32 %v277, %v252
    %v280 = vmin.f32 %v278, %v258
    %v281 = vmin.f32 %v279, %v264
    %v282 = vmin.f32 %v280, %v281
    %v283 = vrot.slane %v282, 4
    %v284 = vmin.f32 %v282, %v283
    %v285 = vrot.slane %v284, 2
    %v286 = vmin.f32 %v284, %v285
    %v287 = vrot.slane %v286, 1
    %v288 = vmin.f32 %v286, %v287
    %v289 = vmin.f32 %v176, %v188
    %v290 = vmin.f32 %v182, %v194
    %v291 = vmin.f32 %v289, %v200
    %v292 = vmin.f32 %v290, %v206
    %v293 = vmin.f32 %v291, %v212
    %v294 = vmin.f32 %v292, %v218
    %v295 = vmin.f32 %v293, %v224
    %v296 = vmin.f32 %v294, %v230
    %v297 = vmin.f32 %v295, %v236
    %v298 = vmin.f32 %v296, %v242
    %v299 = vmin.f32 %v297, %v248
    %v300 = vmin.f32 %v298, %v254
    %v301 = vmin.f32 %v299, %v260
    %v302 = vmin.f32 %v300, %v266
    %v303 = vmin.f32 %v301, %v302
    %v304 = vrot.slane %v303, 4
    %v305 = vmin.f32 %v303, %v304
    %v306 = vrot.slane %v305, 2
    %v307 = vmin.f32 %v305, %v306
    %v308 = vrot.slane %v307, 1
    %v309 = vmin.f32 %v307, %v308
    %vm310 = vcmp.eq.f32.partialorder %v174, %v288
    %vm311 = vcmp.eq.f32.partialorder %v176, %v309
    %vm312 = vcmp.eq.f32.partialorder %v180, %v288
    %vm313 = vcmp.eq.f32.partialorder %v182, %v309
    %vm314 = vcmp.eq.f32.partialorder %v186, %v288
    %vm315 = vcmp.eq.f32.partialorder %v188, %v309
    %vm316 = vcmp.eq.f32.partialorder %v192, %v288
    %vm317 = vcmp.eq.f32.partialorder %v194, %v309
    %vm318 = vcmp.eq.f32.partialorder %v198, %v288
    %vm319 = vcmp.eq.f32.partialorder %v200, %v309
    %vm320 = vcmp.eq.f32.partialorder %v204, %v288
    %vm321 = vcmp.eq.f32.partialorder %v206, %v309
    %vm322 = vcmp.eq.f32.partialorder %v210, %v288
    %vm323 = vcmp.eq.f32.partialorder %v212, %v309
    %vm324 = vcmp.eq.f32.partialorder %v216, %v288
    %vm325 = vcmp.eq.f32.partialorder %v218, %v309
    %vm326 = vcmp.eq.f32.partialorder %v222, %v288
    %vm327 = vcmp.eq.f32.partialorder %v224, %v309
    %vm328 = vcmp.eq.f32.partialorder %v228, %v288
    %vm329 = vcmp.eq.f32.partialorder %v230, %v309
    %vm330 = vcmp.eq.f32.partialorder %v234, %v288
    %vm331 = vcmp.eq.f32.partialorder %v236, %v309
    %vm332 = vcmp.eq.f32.partialorder %v240, %v288
    %vm333 = vcmp.eq.f32.partialorder %v242, %v309
    %vm334 = vcmp.eq.f32.partialorder %v246, %v288
    %vm335 = vcmp.eq.f32.partialorder %v248, %v309
    %vm336 = vcmp.eq.f32.partialorder %v252, %v288
    %vm337 = vcmp.eq.f32.partialorder %v254, %v309
    %vm338 = vcmp.eq.f32.partialorder %v258, %v288
    %vm339 = vcmp.eq.f32.partialorder %v260, %v309
    %vm340 = vcmp.eq.f32.partialorder %v264, %v288
    %vm341 = vcmp.eq.f32.partialorder %v266, %v309
    %v342 = vsel %vm310, %v37, 128
    %v343 = vsel %vm311, %v37, 128
    %v344 = vsel %vm312, %v41, 128
    %v345 = vsel %vm313, %v41, 128
    %v346 = vsel %vm314, %v42, 128
    %v347 = vsel %vm315, %v42, 128
    %v348 = vsel %vm316, %v43, 128
    %v349 = vsel %vm317, %v43, 128
    %v350 = vsel %vm318, %v44, 128
    %v351 = vsel %vm319, %v44, 128
    %v352 = vsel %vm320, %v45, 128
    %v353 = vsel %vm321, %v45, 128
    %v354 = vsel %vm322, %v46, 128
    %v355 = vsel %vm323, %v46, 128
    %v356 = vsel %vm324, %v47, 128
    %v357 = vsel %vm325, %v47, 128
    %v358 = vsel %vm326, %v48, 128
    %v359 = vsel %vm327, %v48, 128
    %v360 = vsel %vm328, %v49, 128
    %v361 = vsel %vm329, %v49, 128
    %v362 = vsel %vm330, %v50, 128
    %v363 = vsel %vm331, %v50, 128
    %v364 = vsel %vm332, %v51, 128
    %v365 = vsel %vm333, %v51, 128
    %v366 = vsel %vm334, %v52, 128
    %v367 = vsel %vm335, %v52, 128
    %v368 = vsel %vm336, %v53, 128
    %v369 = vsel %vm337, %v53, 128
    %v370 = vsel %vm338, %v54, 128
    %v371 = vsel %vm339, %v54, 128
    %v372 = vsel %vm340, %v55, 128
    %v373 = vsel %vm341, %v55, 128
    %vm374 = vcmp.lt.s32.totalorder %v342, %v346
    %v375 = vsel %vm374, %v342, %v346
    %vm376 = vcmp.lt.s32.totalorder %v344, %v348
    %v377 = vsel %vm376, %v344, %v348
    %vm378 = vcmp.lt.s32.totalorder %v375, %v350
    %v379 = vsel %vm378, %v375, %v350
    %vm380 = vcmp.lt.s32.totalorder %v377, %v352
    %v381 = vsel %vm380, %v377, %v352
    %vm382 = vcmp.lt.s32.totalorder %v379, %v354
    %v383 = vsel %vm382, %v379, %v354
    %vm384 = vcmp.lt.s32.totalorder %v381, %v356
    %v385 = vsel %vm384, %v381, %v356
    %vm386 = vcmp.lt.s32.totalorder %v383, %v358
    %v387 = vsel %vm386, %v383, %v358
    %vm388 = vcmp.lt.s32.totalorder %v385, %v360
    %v389 = vsel %vm388, %v385, %v360
    %vm390 = vcmp.lt.s32.totalorder %v387, %v362
    %v391 = vsel %vm390, %v387, %v362
    %vm392 = vcmp.lt.s32.totalorder %v389, %v364
    %v393 = vsel %vm392, %v389, %v364
    %vm394 = vcmp.lt.s32.totalorder %v391, %v366
    %v395 = vsel %vm394, %v391, %v366
    %vm396 = vcmp.lt.s32.totalorder %v393, %v368
    %v397 = vsel %vm396, %v393, %v368
    %vm398 = vcmp.lt.s32.totalorder %v395, %v370
    %v399 = vsel %vm398, %v395, %v370
    %vm400 = vcmp.lt.s32.totalorder %v397, %v372
    %v401 = vsel %vm400, %v397, %v372
    %vm402 = vcmp.lt.s32.totalorder %v399, %v401
    %v403 = vsel %vm402, %v399, %v401
    %v404 = vrot.slane %v403, 4
    %vm405 = vcmp.lt.s32.totalorder %v403, %v404
    %v406 = vsel %vm405, %v403, %v404
    %v407 = vrot.slane %v406, 2
    %vm408 = vcmp.lt.s32.totalorder %v406, %v407
    %v409 = vsel %vm408, %v406, %v407
    %v410 = vrot.slane %v409, 1
    %vm411 = vcmp.lt.s32.totalorder %v409, %v410
    %v412 = vsel %vm411, %v409, %v410
    %vm413 = vcmp.lt.s32.totalorder %v343, %v347
    %v414 = vsel %vm413, %v343, %v347
    %vm415 = vcmp.lt.s32.totalorder %v345, %v349
    %v416 = vsel %vm415, %v345, %v349
    %vm417 = vcmp.lt.s32.totalorder %v414, %v351
    %v418 = vsel %vm417, %v414, %v351
    %vm419 = vcmp.lt.s32.totalorder %v416, %v353
    %v420 = vsel %vm419, %v416, %v353
    %vm421 = vcmp.lt.s32.totalorder %v418, %v355
    %v422 = vsel %vm421, %v418, %v355
    %vm423 = vcmp.lt.s32.totalorder %v420, %v357
    %v424 = vsel %vm423, %v420, %v357
    %vm425 = vcmp.lt.s32.totalorder %v422, %v359
    %v426 = vsel %vm425, %v422, %v359
    %vm427 = vcmp.lt.s32.totalorder %v424, %v361
    %v428 = vsel %vm427, %v424, %v361
    %vm429 = vcmp.lt.s32.totalorder %v426, %v363
    %v430 = vsel %vm429, %v426, %v363
    %vm431 = vcmp.lt.s32.totalorder %v428, %v365
    %v432 = vsel %vm431, %v428, %v365
    %vm433 = vcmp.lt.s32.totalorder %v430, %v367
    %v434 = vsel %vm433, %v430, %v367
    %vm435 = vcmp.lt.s32.totalorder %v432, %v369
    %v436 = vsel %vm435, %v432, %v369
    %vm437 = vcmp.lt.s32.totalorder %v434, %v371
    %v438 = vsel %vm437, %v434, %v371
    %vm439 = vcmp.lt.s32.totalorder %v436, %v373
    %v440 = vsel %vm439, %v436, %v373
    %vm441 = vcmp.lt.s32.totalorder %v438, %v440
    %v442 = vsel %vm441, %v438, %v440
    %v443 = vrot.slane %v442, 4
    %vm444 = vcmp.lt.s32.totalorder %v442, %v443
    %v445 = vsel %vm444, %v442, %v443
    %v446 = vrot.slane %v445, 2
    %vm447 = vcmp.lt.s32.totalorder %v445, %v446
    %v448 = vsel %vm447, %v445, %v446
    %v449 = vrot.slane %v448, 1
    %vm450 = vcmp.lt.s32.totalorder %v448, %v449
    %v451 = vsel %vm450, %v448, %v449
    %vm452 = vcmp.eq.s32.totalorder %v37, %v412
    %vm453 = vcmp.eq.s32.totalorder %v37, %v451
    %vm454 = vcmp.eq.s32.totalorder %v41, %v412
    %vm455 = vcmp.eq.s32.totalorder %v41, %v451
    %vm456 = vcmp.eq.s32.totalorder %v42, %v412
    %vm457 = vcmp.eq.s32.totalorder %v42, %v451
    %vm458 = vcmp.eq.s32.totalorder %v43, %v412
    %vm459 = vcmp.eq.s32.totalorder %v43, %v451
    %vm460 = vcmp.eq.s32.totalorder %v44, %v412
    %vm461 = vcmp.eq.s32.totalorder %v44, %v451
    %vm462 = vcmp.eq.s32.totalorder %v45, %v412
    %vm463 = vcmp.eq.s32.totalorder %v45, %v451
    %vm464 = vcmp.eq.s32.totalorder %v46, %v412
    %vm465 = vcmp.eq.s32.totalorder %v46, %v451
    %vm466 = vcmp.eq.s32.totalorder %v47, %v412
    %vm467 = vcmp.eq.s32.totalorder %v47, %v451
    %vm468 = vcmp.eq.s32.totalorder %v48, %v412
    %vm469 = vcmp.eq.s32.totalorder %v48, %v451
    %vm470 = vcmp.eq.s32.totalorder %v49, %v412
    %vm471 = vcmp.eq.s32.totalorder %v49, %v451
    %vm472 = vcmp.eq.s32.totalorder %v50, %v412
    %vm473 = vcmp.eq.s32.totalorder %v50, %v451
    %vm474 = vcmp.eq.s32.totalorder %v51, %v412
    %vm475 = vcmp.eq.s32.totalorder %v51, %v451
    %vm476 = vcmp.eq.s32.totalorder %v52, %v412
    %vm477 = vcmp.eq.s32.totalorder %v52, %v451
    %vm478 = vcmp.eq.s32.totalorder %v53, %v412
    %vm479 = vcmp.eq.s32.totalorder %v53, %v451
    %vm480 = vcmp.eq.s32.totalorder %v54, %v412
    %vm481 = vcmp.eq.s32.totalorder %v54, %v451
    %vm482 = vcmp.eq.s32.totalorder %v55, %v412
    %vm483 = vcmp.eq.s32.totalorder %v55, %v451
    %v484 = vsel %vm452, 1, 0
    %v485 = vsel %vm453, 1, 0
    %v486 = vsel %vm454, 1, 0
    %v487 = vsel %vm455, 1, 0
    %v488 = vsel %vm456, 1, 0
    %v489 = vsel %vm457, 1, 0
    %v490 = vsel %vm458, 1, 0
    %v491 = vsel %vm459, 1, 0
    %v492 = vsel %vm460, 1, 0
    %v493 = vsel %vm461, 1, 0
    %v494 = vsel %vm462, 1, 0
    %v495 = vsel %vm463, 1, 0
    %v496 = vsel %vm464, 1, 0
    %v497 = vsel %vm465, 1, 0
    %v498 = vsel %vm466, 1, 0
    %v499 = vsel %vm467, 1, 0
    %v500 = vsel %vm468, 1, 0
    %v501 = vsel %vm469, 1, 0
    %v502 = vsel %vm470, 1, 0
    %v503 = vsel %vm471, 1, 0
    %v504 = vsel %vm472, 1, 0
    %v505 = vsel %vm473, 1, 0
    %v506 = vsel %vm474, 1, 0
    %v507 = vsel %vm475, 1, 0
    %v508 = vsel %vm476, 1, 0
    %v509 = vsel %vm477, 1, 0
    %v510 = vsel %vm478, 1, 0
    %v511 = vsel %vm479, 1, 0
    %v512 = vsel %vm480, 1, 0
    %v513 = vsel %vm481, 1, 0
    %v514 = vsel %vm482, 1, 0
    %v515 = vsel %vm483, 1, 0
    %v516 = vcvt.s32.f32 %v484
    %v517 = vcvt.s32.f32 %v485
    %v518 = vcvt.s32.f32 %v486
    %v519 = vcvt.s32.f32 %v487
    %v520 = vcvt.s32.f32 %v488
    %v521 = vcvt.s32.f32 %v489
    %v522 = vcvt.s32.f32 %v490
    %v523 = vcvt.s32.f32 %v491
    %v524 = vcvt.s32.f32 %v492
    %v525 = vcvt.s32.f32 %v493
    %v526 = vcvt.s32.f32 %v494
    %v527 = vcvt.s32.f32 %v495
    %v528 = vcvt.s32.f32 %v496
    %v529 = vcvt.s32.f32 %v497
    %v530 = vcvt.s32.f32 %v498
    %v531 = vcvt.s32.f32 %v499
    %v532 = vcvt.s32.f32 %v500
    %v533 = vcvt.s32.f32 %v501
    %v534 = vcvt.s32.f32 %v502
    %v535 = vcvt.s32.f32 %v503
    %v536 = vcvt.s32.f32 %v504
    %v537 = vcvt.s32.f32 %v505
    %v538 = vcvt.s32.f32 %v506
    %v539 = vcvt.s32.f32 %v507
    %v540 = vcvt.s32.f32 %v508
    %v541 = vcvt.s32.f32 %v509
    %v542 = vcvt.s32.f32 %v510
    %v543 = vcvt.s32.f32 %v511
    %v544 = vcvt.s32.f32 %v512
    %v545 = vcvt.s32.f32 %v513
    %v546 = vcvt.s32.f32 %v514
    %v547 = vcvt.s32.f32 %v515
    %548 = vmatprep.subr.mxu0 %v517
    %549 = vmatpush1.msra.mxu0 %v516
    %550 = vmatprep.subr.mxu0 %v519
    %551 = vmatpush1.msra.mxu0 %v518
    %552 = vmatprep.subr.mxu0 %v521
    %553 = vmatpush1.msra.mxu0 %v520
    %554 = vmatprep.subr.mxu0 %v523
    %555 = vmatpush1.msra.mxu0 %v522
    %556 = vmatprep.subr.mxu0 %v525
    %557 = vmatpush1.msra.mxu0 %v524
    %558 = vmatprep.subr.mxu0 %v527
    %559 = vmatpush1.msra.mxu0 %v526
    %560 = vmatprep.subr.mxu0 %v529
    %561 = vmatpush1.msra.mxu0 %v528
    %562 = vmatprep.subr.mxu0 %v531
    %563 = vmatpush1.msra.mxu0 %v530
    %564 = vmatprep.subr.mxu0 %v533
    %565 = vmatpush1.msra.mxu0 %v532
    %566 = vmatprep.subr.mxu0 %v535
    %567 = vmatpush1.msra.mxu0 %v534
    %568 = vmatprep.subr.mxu0 %v537
    %569 = vmatpush1.msra.mxu0 %v536
    %570 = vmatprep.subr.mxu0 %v539
    %571 = vmatpush1.msra.mxu0 %v538
    %572 = vmatprep.subr.mxu0 %v541
    %573 = vmatpush1.msra.mxu0 %v540
    %574 = vmatprep.subr.mxu0 %v543
    %575 = vmatpush1.msra.mxu0 %v542
    %576 = vmatprep.subr.mxu0 %v545
    %577 = vmatpush1.msra.mxu0 %v544
    %578 = vmatprep.subr.mxu0 %v547
    %579 = vmatpush1.msra.mxu0 %v546
    %580 = vmatprep.subr.mxu0 0.0
    %581 = vmatpush1.msra.mxu0 0.0
    %582 = vmatprep.subr.mxu0 0.0
    %583 = vmatpush1.msra.mxu0 0.0
    %584 = vmatprep.subr.mxu0 0.0
    %585 = vmatpush1.msra.mxu0 0.0
    %586 = vmatprep.subr.mxu0 0.0
    %587 = vmatpush1.msra.mxu0 0.0
    %588 = vmatprep.subr.mxu0 0.0
    %589 = vmatpush1.msra.mxu0 0.0
    %590 = vmatprep.subr.mxu0 0.0
    %591 = vmatpush1.msra.mxu0 0.0
    %592 = vmatprep.subr.mxu0 0.0
    %593 = vmatpush1.msra.mxu0 0.0
    %594 = vmatprep.subr.mxu0 0.0
    %595 = vmatpush1.msra.mxu0 0.0
    %596 = vmatprep.subr.mxu0 0.0
    %597 = vmatpush1.msra.mxu0 0.0
    %598 = vmatprep.subr.mxu0 0.0
    %599 = vmatpush1.msra.mxu0 0.0
    %600 = vmatprep.subr.mxu0 0.0
    %601 = vmatpush1.msra.mxu0 0.0
    %602 = vmatprep.subr.mxu0 0.0
    %603 = vmatpush1.msra.mxu0 0.0
    %604 = vmatprep.subr.mxu0 0.0
    %605 = vmatpush1.msra.mxu0 0.0
    %606 = vmatprep.subr.mxu0 0.0
    %607 = vmatpush1.msra.mxu0 0.0
    %608 = vmatprep.subr.mxu0 0.0
    %609 = vmatpush1.msra.mxu0 0.0
    %610 = vmatprep.subr.mxu0 0.0
    %611 = vmatpush1.msra.mxu0 0.0
    %612 = vmatprep.mubr.f32.mxu0 0.0
    %613 = vmatmul.mubr.f32.gmra.mrb[0].mxu0 %v35
    %v614 = vpop.f32.mrb[0].mxu0
    %v615 = vadd.f32 0.0, %v614
    %v616 = vpop.f32.mrb[0].mxu0
    %v617 = vadd.f32 0.0, %v616
    %618 = vdwg.mxu0
    %619 = vst [vmem:[#allocation2] sm:$0xff] %v615
    %620 = vst [vmem:[#allocation2 + $0x8] sm:$0xff] %v617
    %v621 = vadd.f32 %v516, %v517
    %622 = vadd.xlane.f32.xlu0 %v621
    %v623 = vpop.xlane.xlu0 %622
    %v624 = vadd.f32 %v518, %v519
    %625 = vadd.xlane.f32.xlu0 %v624
    %v626 = vpop.xlane.xlu0 %625
    %v627 = vadd.f32 %v520, %v521
    %628 = vadd.xlane.f32.xlu0 %v627
    %v629 = vpop.xlane.xlu0 %628
    %v630 = vadd.f32 %v522, %v523
    %631 = vadd.xlane.f32.xlu0 %v630
    %v632 = vpop.xlane.xlu0 %631
    %v633 = vadd.f32 %v524, %v525
    %634 = vadd.xlane.f32.xlu0 %v633
    %v635 = vpop.xlane.xlu0 %634
    %v636 = vadd.f32 %v526, %v527
    %637 = vadd.xlane.f32.xlu0 %v636
    %v638 = vpop.xlane.xlu0 %637
    %v639 = vadd.f32 %v528, %v529
    %640 = vadd.xlane.f32.xlu0 %v639
    %v641 = vpop.xlane.xlu0 %640
    %v642 = vadd.f32 %v530, %v531
    %643 = vadd.xlane.f32.xlu0 %v642
    %v644 = vpop.xlane.xlu0 %643
    %v645 = vadd.f32 %v532, %v533
    %646 = vadd.xlane.f32.xlu0 %v645
    %v647 = vpop.xlane.xlu0 %646
    %v648 = vadd.f32 %v534, %v535
    %649 = vadd.xlane.f32.xlu0 %v648
    %v650 = vpop.xlane.xlu0 %649
    %v651 = vadd.f32 %v536, %v537
    %652 = vadd.xlane.f32.xlu0 %v651
    %v653 = vpop.xlane.xlu0 %652
    %v654 = vadd.f32 %v538, %v539
    %655 = vadd.xlane.f32.xlu0 %v654
    %v656 = vpop.xlane.xlu0 %655
    %v657 = vadd.f32 %v540, %v541
    %658 = vadd.xlane.f32.xlu0 %v657
    %v659 = vpop.xlane.xlu0 %658
    %v660 = vadd.f32 %v542, %v543
    %661 = vadd.xlane.f32.xlu0 %v660
    %v662 = vpop.xlane.xlu0 %661
    %v663 = vadd.f32 %v544, %v545
    %664 = vadd.xlane.f32.xlu0 %v663
    %v665 = vpop.xlane.xlu0 %664
    %v666 = vadd.f32 %v546, %v547
    %667 = vadd.xlane.f32.xlu0 %v666
    %v668 = vpop.xlane.xlu0 %667
    %v669 = vadd.f32 %v623, 0.0
    %v670 = vadd.f32 %v626, 0.0
    %v671 = vadd.f32 %v629, 0.0
    %v672 = vadd.f32 %v632, 0.0
    %v673 = vadd.f32 %v635, 0.0
    %v674 = vadd.f32 %v638, 0.0
    %v675 = vadd.f32 %v641, 0.0
    %v676 = vadd.f32 %v644, 0.0
    %v677 = vadd.f32 %v647, 0.0
    %v678 = vadd.f32 %v650, 0.0
    %v679 = vadd.f32 %v653, 0.0
    %v680 = vadd.f32 %v656, 0.0
    %v681 = vadd.f32 %v659, 0.0
    %v682 = vadd.f32 %v662, 0.0
    %v683 = vadd.f32 %v665, 0.0
    %v684 = vadd.f32 %v668, 0.0
    %v685 = vsub.f32 %v615, %v56
    %v686 = vsub.f32 %v617, %v57
    %v687 = vmul.f32 %v685, %v685
    %v688 = vmul.f32 %v686, %v686
    %v689 = vadd.f32 %v687, %v688
    %690 = vadd.xlane.f32.xlu0 %v689
    %v691 = vpop.xlane.xlu0 %690
    %v692 = vrot.slane %v691, 4
    %v693 = vadd.f32 %v691, %v692
    %v694 = vrot.slane %v693, 2
    %v695 = vadd.f32 %v693, %v694
    %v696 = vrot.slane %v695, 1
    %v697 = vadd.f32 %v695, %v696
    %s698 = vtos %v697
    %s699 = sadd.f32 %s698, 0.0
    %s700 = scalar_lea.vmem %s0, 16
    %v701 = vld [vmem:[%s700] sm:$0xff]
    %v702 = vld [vmem:[%s700 + $0x8] sm:$0xff]
    %703 = vmatprep.subr.mxu0 %v702
    %704 = vmatpush1.msra.mxu0 %v701
    %705 = vmatprep.subr.mxu0 %v40
    %706 = vmatpush1.msra.mxu0 %v40
    %707 = vmatprep.subr.mxu0 0.0
    %708 = vmatpush1.msra.mxu0 0.0
    %709 = vmatprep.subr.mxu0 0.0
    %710 = vmatpush1.msra.mxu0 0.0
    %711 = vmatprep.subr.mxu0 0.0
    %712 = vmatpush1.msra.mxu0 0.0
    %713 = vmatprep.subr.mxu0 0.0
    %714 = vmatpush1.msra.mxu0 0.0
    %715 = vmatprep.subr.mxu0 0.0
    %716 = vmatpush1.msra.mxu0 0.0
    %717 = vmatprep.subr.mxu0 0.0
    %718 = vmatpush1.msra.mxu0 0.0
    %719 = vmatprep.subr.mxu0 0.0
    %720 = vmatpush1.msra.mxu0 0.0
    %721 = vmatprep.subr.mxu0 0.0
    %722 = vmatpush1.msra.mxu0 0.0
    %723 = vmatprep.subr.mxu0 0.0
    %724 = vmatpush1.msra.mxu0 0.0
    %725 = vmatprep.subr.mxu0 0.0
    %726 = vmatpush1.msra.mxu0 0.0
    %727 = vmatprep.subr.mxu0 0.0
    %728 = vmatpush1.msra.mxu0 0.0
    %729 = vmatprep.subr.mxu0 0.0
    %730 = vmatpush1.msra.mxu0 0.0
    %731 = vmatprep.subr.mxu0 0.0
    %732 = vmatpush1.msra.mxu0 0.0
    %733 = vmatprep.subr.mxu0 0.0
    %734 = vmatpush1.msra.mxu0 0.0
    %735 = vmatprep.subr.mxu0 0.0
    %736 = vmatpush1.msra.mxu0 0.0
    %737 = vmatprep.subr.mxu0 0.0
    %738 = vmatpush1.msra.mxu0 0.0
    %739 = vmatprep.subr.mxu0 0.0
    %740 = vmatpush1.msra.mxu0 0.0
    %741 = vmatprep.subr.mxu0 0.0
    %742 = vmatpush1.msra.mxu0 0.0
    %743 = vmatprep.subr.mxu0 0.0
    %744 = vmatpush1.msra.mxu0 0.0
    %745 = vmatprep.subr.mxu0 0.0
    %746 = vmatpush1.msra.mxu0 0.0
    %747 = vmatprep.subr.mxu0 0.0
    %748 = vmatpush1.msra.mxu0 0.0
    %749 = vmatprep.subr.mxu0 0.0
    %750 = vmatpush1.msra.mxu0 0.0
    %751 = vmatprep.subr.mxu0 0.0
    %752 = vmatpush1.msra.mxu0 0.0
    %753 = vmatprep.subr.mxu0 0.0
    %754 = vmatpush1.msra.mxu0 0.0
    %755 = vmatprep.subr.mxu0 0.0
    %756 = vmatpush1.msra.mxu0 0.0
    %757 = vmatprep.subr.mxu0 0.0
    %758 = vmatpush1.msra.mxu0 0.0
    %759 = vmatprep.subr.mxu0 0.0
    %760 = vmatpush1.msra.mxu0 0.0
    %761 = vmatprep.subr.mxu0 0.0
    %762 = vmatpush1.msra.mxu0 0.0
    %763 = vmatprep.subr.mxu0 0.0
    %764 = vmatpush1.msra.mxu0 0.0
    %765 = vmatprep.subr.mxu0 0.0
    %766 = vmatpush1.msra.mxu0 0.0
    %767 = vmatprep.mubr.f32.mxu0 0.0
    %768 = vmatmul.mubr.f32.gmra.mrb[0].mxu0 %v60
    %v769 = vpop.f32.mrb[0].mxu0
    %v770 = vadd.f32 0.0, %v769
    %v771 = vpop.f32.mrb[0].mxu0
    %v772 = vadd.f32 0.0, %v771
    %773 = vmatprep.mubr.f32.mxu0 0.0
    %774 = vmatmul.mubr.f32.gmra.mrb[0].mxu0 %v63
    %v775 = vpop.f32.mrb[0].mxu0
    %v776 = vadd.f32 0.0, %v775
    %v777 = vpop.f32.mrb[0].mxu0
    %v778 = vadd.f32 0.0, %v777
    %779 = vmatprep.mubr.f32.mxu0 0.0
    %780 = vmatmul.mubr.f32.gmra.mrb[0].mxu0 %v66
    %v781 = vpop.f32.mrb[0].mxu0
    %v782 = vadd.f32 0.0, %v781
    %v783 = vpop.f32.mrb[0].mxu0
    %v784 = vadd.f32 0.0, %v783
    %785 = vmatprep.mubr.f32.mxu0 0.0
    %786 = vmatmul.mubr.f32.gmra.mrb[0].mxu0 %v69
    %v787 = vpop.f32.mrb[0].mxu0
    %v788 = vadd.f32 0.0, %v787
    %v789 = vpop.f32.mrb[0].mxu0
    %v790 = vadd.f32 0.0, %v789
    %791 = vmatprep.mubr.f32.mxu0 0.0
    %792 = vmatmul.mubr.f32.gmra.mrb[0].mxu0 %v72
    %v793 = vpop.f32.mrb[0].mxu0
    %v794 = vadd.f32 0.0, %v793
    %v795 = vpop.f32.mrb[0].mxu0
    %v796 = vadd.f32 0.0, %v795
    %797 = vmatprep.mubr.f32.mxu0 0.0
    %798 = vmatmul.mubr.f32.gmra.mrb[0].mxu0 %v75
    %v799 = vpop.f32.mrb[0].mxu0
    %v800 = vadd.f32 0.0, %v799
    %v801 = vpop.f32.mrb[0].mxu0
    %v802 = vadd.f32 0.0, %v801
    %803 = vmatprep.mubr.f32.mxu0 0.0
    %804 = vmatmul.mubr.f32.gmra.mrb[0].mxu0 %v78
    %v805 = vpop.f32.mrb[0].mxu0
    %v806 = vadd.f32 0.0, %v805
    %v807 = vpop.f32.mrb[0].mxu0
    %v808 = vadd.f32 0.0, %v807
    %809 = vmatprep.mubr.f32.mxu0 0.0
    %810 = vmatmul.mubr.f32.gmra.mrb[0].mxu0 %v81
    %v811 = vpop.f32.mrb[0].mxu0
    %v812 = vadd.f32 0.0, %v811
    %v813 = vpop.f32.mrb[0].mxu0
    %v814 = vadd.f32 0.0, %v813
    %815 = vmatprep.mubr.f32.mxu0 0.0
    %816 = vmatmul.mubr.f32.gmra.mrb[0].mxu0 %v84
    %v817 = vpop.f32.mrb[0].mxu0
    %v818 = vadd.f32 0.0, %v817
    %v819 = vpop.f32.mrb[0].mxu0
    %v820 = vadd.f32 0.0, %v819
    %821 = vmatprep.mubr.f32.mxu0 0.0
    %822 = vmatmul.mubr.f32.gmra.mrb[0].mxu0 %v87
    %v823 = vpop.f32.mrb[0].mxu0
    %v824 = vadd.f32 0.0, %v823
    %v825 = vpop.f32.mrb[0].mxu0
    %v826 = vadd.f32 0.0, %v825
    %827 = vmatprep.mubr.f32.mxu0 0.0
    %828 = vmatmul.mubr.f32.gmra.mrb[0].mxu0 %v90
    %v829 = vpop.f32.mrb[0].mxu0
    %v830 = vadd.f32 0.0, %v829
    %v831 = vpop.f32.mrb[0].mxu0
    %v832 = vadd.f32 0.0, %v831
    %833 = vmatprep.mubr.f32.mxu0 0.0
    %834 = vmatmul.mubr.f32.gmra.mrb[0].mxu0 %v93
    %v835 = vpop.f32.mrb[0].mxu0
    %v836 = vadd.f32 0.0, %v835
    %v837 = vpop.f32.mrb[0].mxu0
    %v838 = vadd.f32 0.0, %v837
    %839 = vmatprep.mubr.f32.mxu0 0.0
    %840 = vmatmul.mubr.f32.gmra.mrb[0].mxu0 %v96
    %v841 = vpop.f32.mrb[0].mxu0
    %v842 = vadd.f32 0.0, %v841
    %v843 = vpop.f32.mrb[0].mxu0
    %v844 = vadd.f32 0.0, %v843
    %845 = vmatprep.mubr.f32.mxu0 0.0
    %846 = vmatmul.mubr.f32.gmra.mrb[0].mxu0 %v99
    %v847 = vpop.f32.mrb[0].mxu0
    %v848 = vadd.f32 0.0, %v847
    %v849 = vpop.f32.mrb[0].mxu0
    %v850 = vadd.f32 0.0, %v849
    %851 = vmatprep.mubr.f32.mxu0 0.0
    %852 = vmatmul.mubr.f32.gmra.mrb[0].mxu0 %v102
    %v853 = vpop.f32.mrb[0].mxu0
    %v854 = vadd.f32 0.0, %v853
    %v855 = vpop.f32.mrb[0].mxu0
    %v856 = vadd.f32 0.0, %v855
    %857 = vmatprep.mubr.f32.mxu0 0.0
    %858 = vmatmul.mubr.f32.gmra.mrb[0].mxu0 %v105
    %v859 = vpop.f32.mrb[0].mxu0
    %v860 = vadd.f32 0.0, %v859
    %v861 = vpop.f32.mrb[0].mxu0
    %v862 = vadd.f32 0.0, %v861
    %863 = vdwg.mxu0
    %v864 = vmin.f32 %v770, %v782
    %v865 = vmin.f32 %v776, %v788
    %v866 = vmin.f32 %v864, %v794
    %v867 = vmin.f32 %v865, %v800
    %v868 = vmin.f32 %v866, %v806
    %v869 = vmin.f32 %v867, %v812
    %v870 = vmin.f32 %v868, %v818
    %v871 = vmin.f32 %v869, %v824
    %v872 = vmin.f32 %v870, %v830
    %v873 = vmin.f32 %v871, %v836
    %v874 = vmin.f32 %v872, %v842
    %v875 = vmin.f32 %v873, %v848
    %v876 = vmin.f32 %v874, %v854
    %v877 = vmin.f32 %v875, %v860
    %v878 = vmin.f32 %v876, %v877
    %v879 = vrot.slane %v878, 4
    %v880 = vmin.f32 %v878, %v879
    %v881 = vrot.slane %v880, 2
    %v882 = vmin.f32 %v880, %v881
    %v883 = vrot.slane %v882, 1
    %v884 = vmin.f32 %v882, %v883
    %v885 = vmin.f32 %v772, %v784
    %v886 = vmin.f32 %v778, %v790
    %v887 = vmin.f32 %v885, %v796
    %v888 = vmin.f32 %v886, %v802
    %v889 = vmin.f32 %v887, %v808
    %v890 = vmin.f32 %v888, %v814
    %v891 = vmin.f32 %v889, %v820
    %v892 = vmin.f32 %v890, %v826
    %v893 = vmin.f32 %v891, %v832
    %v894 = vmin.f32 %v892, %v838
    %v895 = vmin.f32 %v893, %v844
    %v896 = vmin.f32 %v894, %v850
    %v897 = vmin.f32 %v895, %v856
    %v898 = vmin.f32 %v896, %v862
    %v899 = vmin.f32 %v897, %v898
    %v900 = vrot.slane %v899, 4
    %v901 = vmin.f32 %v899, %v900
    %v902 = vrot.slane %v901, 2
    %v903 = vmin.f32 %v901, %v902
    %v904 = vrot.slane %v903, 1
    %v905 = vmin.f32 %v903, %v904
    %vm906 = vcmp.eq.f32.partialorder %v770, %v884
    %vm907 = vcmp.eq.f32.partialorder %v772, %v905
    %vm908 = vcmp.eq.f32.partialorder %v776, %v884
    %vm909 = vcmp.eq.f32.partialorder %v778, %v905
    %vm910 = vcmp.eq.f32.partialorder %v782, %v884
    %vm911 = vcmp.eq.f32.partialorder %v784, %v905
    %vm912 = vcmp.eq.f32.partialorder %v788, %v884
    %vm913 = vcmp.eq.f32.partialorder %v790, %v905
    %vm914 = vcmp.eq.f32.partialorder %v794, %v884
    %vm915 = vcmp.eq.f32.partialorder %v796, %v905
    %vm916 = vcmp.eq.f32.partialorder %v800, %v884
    %vm917 = vcmp.eq.f32.partialorder %v802, %v905
    %vm918 = vcmp.eq.f32.partialorder %v806, %v884
    %vm919 = vcmp.eq.f32.partialorder %v808, %v905
    %vm920 = vcmp.eq.f32.partialorder %v812, %v884
    %vm921 = vcmp.eq.f32.partialorder %v814, %v905
    %vm922 = vcmp.eq.f32.partialorder %v818, %v884
    %vm923 = vcmp.eq.f32.partialorder %v820, %v905
    %vm924 = vcmp.eq.f32.partialorder %v824, %v884
    %vm925 = vcmp.eq.f32.partialorder %v826, %v905
    %vm926 = vcmp.eq.f32.partialorder %v830, %v884
    %vm927 = vcmp.eq.f32.partialorder %v832, %v905
    %vm928 = vcmp.eq.f32.partialorder %v836, %v884
    %vm929 = vcmp.eq.f32.partialorder %v838, %v905
    %vm930 = vcmp.eq.f32.partialorder %v842, %v884
    %vm931 = vcmp.eq.f32.partialorder %v844, %v905
    %vm932 = vcmp.eq.f32.partialorder %v848, %v884
    %vm933 = vcmp.eq.f32.partialorder %v850, %v905
    %vm934 = vcmp.eq.f32.partialorder %v854, %v884
    %vm935 = vcmp.eq.f32.partialorder %v856, %v905
    %vm936 = vcmp.eq.f32.partialorder %v860, %v884
    %vm937 = vcmp.eq.f32.partialorder %v862, %v905
    %v938 = vsel %vm906, %v37, 128
    %v939 = vsel %vm907, %v37, 128
    %v940 = vsel %vm908, %v41, 128
    %v941 = vsel %vm909, %v41, 128
    %v942 = vsel %vm910, %v42, 128
    %v943 = vsel %vm911, %v42, 128
    %v944 = vsel %vm912, %v43, 128
    %v945 = vsel %vm913, %v43, 128
    %v946 = vsel %vm914, %v44, 128
    %v947 = vsel %vm915, %v44, 128
    %v948 = vsel %vm916, %v45, 128
    %v949 = vsel %vm917, %v45, 128
    %v950 = vsel %vm918, %v46, 128
    %v951 = vsel %vm919, %v46, 128
    %v952 = vsel %vm920, %v47, 128
    %v953 = vsel %vm921, %v47, 128
    %v954 = vsel %vm922, %v48, 128
    %v955 = vsel %vm923, %v48, 128
    %v956 = vsel %vm924, %v49, 128
    %v957 = vsel %vm925, %v49, 128
    %v958 = vsel %vm926, %v50, 128
    %v959 = vsel %vm927, %v50, 128
    %v960 = vsel %vm928, %v51, 128
    %v961 = vsel %vm929, %v51, 128
    %v962 = vsel %vm930, %v52, 128
    %v963 = vsel %vm931, %v52, 128
    %v964 = vsel %vm932, %v53, 128
    %v965 = vsel %vm933, %v53, 128
    %v966 = vsel %vm934, %v54, 128
    %v967 = vsel %vm935, %v54, 128
    %v968 = vsel %vm936, %v55, 128
    %v969 = vsel %vm937, %v55, 128
    %vm970 = vcmp.lt.s32.totalorder %v938, %v942
    %v971 = vsel %vm970, %v938, %v942
    %vm972 = vcmp.lt.s32.totalorder %v940, %v944
    %v973 = vsel %vm972, %v940, %v944
    %vm974 = vcmp.lt.s32.totalorder %v971, %v946
    %v975 = vsel %vm974, %v971, %v946
    %vm976 = vcmp.lt.s32.totalorder %v973, %v948
    %v977 = vsel %vm976, %v973, %v948
    %vm978 = vcmp.lt.s32.totalorder %v975, %v950
    %v979 = vsel %vm978, %v975, %v950
    %vm980 = vcmp.lt.s32.totalorder %v977, %v952
    %v981 = vsel %vm980, %v977, %v952
    %vm982 = vcmp.lt.s32.totalorder %v979, %v954
    %v983 = vsel %vm982, %v979, %v954
    %vm984 = vcmp.lt.s32.totalorder %v981, %v956
    %v985 = vsel %vm984, %v981, %v956
    %vm986 = vcmp.lt.s32.totalorder %v983, %v958
    %v987 = vsel %vm986, %v983, %v958
    %vm988 = vcmp.lt.s32.totalorder %v985, %v960
    %v989 = vsel %vm988, %v985, %v960
    %vm990 = vcmp.lt.s32.totalorder %v987, %v962
    %v991 = vsel %vm990, %v987, %v962
    %vm992 = vcmp.lt.s32.totalorder %v989, %v964
    %v993 = vsel %vm992, %v989, %v964
    %vm994 = vcmp.lt.s32.totalorder %v991, %v966
    %v995 = vsel %vm994, %v991, %v966
    %vm996 = vcmp.lt.s32.totalorder %v993, %v968
    %v997 = vsel %vm996, %v993, %v968
    %vm998 = vcmp.lt.s32.totalorder %v995, %v997
    %v999 = vsel %vm998, %v995, %v997
    %v1000 = vrot.slane %v999, 4
    %vm1001 = vcmp.lt.s32.totalorder %v999, %v1000
    %v1002 = vsel %vm1001, %v999, %v1000
    %v1003 = vrot.slane %v1002, 2
    %vm1004 = vcmp.lt.s32.totalorder %v1002, %v1003
    %v1005 = vsel %vm1004, %v1002, %v1003
    %v1006 = vrot.slane %v1005, 1
    %vm1007 = vcmp.lt.s32.totalorder %v1005, %v1006
    %v1008 = vsel %vm1007, %v1005, %v1006
    %vm1009 = vcmp.lt.s32.totalorder %v939, %v943
    %v1010 = vsel %vm1009, %v939, %v943
    %vm1011 = vcmp.lt.s32.totalorder %v941, %v945
    %v1012 = vsel %vm1011, %v941, %v945
    %vm1013 = vcmp.lt.s32.totalorder %v1010, %v947
    %v1014 = vsel %vm1013, %v1010, %v947
    %vm1015 = vcmp.lt.s32.totalorder %v1012, %v949
    %v1016 = vsel %vm1015, %v1012, %v949
    %vm1017 = vcmp.lt.s32.totalorder %v1014, %v951
    %v1018 = vsel %vm1017, %v1014, %v951
    %vm1019 = vcmp.lt.s32.totalorder %v1016, %v953
    %v1020 = vsel %vm1019, %v1016, %v953
    %vm1021 = vcmp.lt.s32.totalorder %v1018, %v955
    %v1022 = vsel %vm1021, %v1018, %v955
    %vm1023 = vcmp.lt.s32.totalorder %v1020, %v957
    %v1024 = vsel %vm1023, %v1020, %v957
    %vm1025 = vcmp.lt.s32.totalorder %v1022, %v959
    %v1026 = vsel %vm1025, %v1022, %v959
    %vm1027 = vcmp.lt.s32.totalorder %v1024, %v961
    %v1028 = vsel %vm1027, %v1024, %v961
    %vm1029 = vcmp.lt.s32.totalorder %v1026, %v963
    %v1030 = vsel %vm1029, %v1026, %v963
    %vm1031 = vcmp.lt.s32.totalorder %v1028, %v965
    %v1032 = vsel %vm1031, %v1028, %v965
    %vm1033 = vcmp.lt.s32.totalorder %v1030, %v967
    %v1034 = vsel %vm1033, %v1030, %v967
    %vm1035 = vcmp.lt.s32.totalorder %v1032, %v969
    %v1036 = vsel %vm1035, %v1032, %v969
    %vm1037 = vcmp.lt.s32.totalorder %v1034, %v1036
    %v1038 = vsel %vm1037, %v1034, %v1036
    %v1039 = vrot.slane %v1038, 4
    %vm1040 = vcmp.lt.s32.totalorder %v1038, %v1039
    %v1041 = vsel %vm1040, %v1038, %v1039
    %v1042 = vrot.slane %v1041, 2
    %vm1043 = vcmp.lt.s32.totalorder %v1041, %v1042
    %v1044 = vsel %vm1043, %v1041, %v1042
    %v1045 = vrot.slane %v1044, 1
    %vm1046 = vcmp.lt.s32.totalorder %v1044, %v1045
    %v1047 = vsel %vm1046, %v1044, %v1045
    %vm1048 = vcmp.eq.s32.totalorder %v37, %v1008
    %vm1049 = vcmp.eq.s32.totalorder %v37, %v1047
    %vm1050 = vcmp.eq.s32.totalorder %v41, %v1008
    %vm1051 = vcmp.eq.s32.totalorder %v41, %v1047
    %vm1052 = vcmp.eq.s32.totalorder %v42, %v1008
    %vm1053 = vcmp.eq.s32.totalorder %v42, %v1047
    %vm1054 = vcmp.eq.s32.totalorder %v43, %v1008
    %vm1055 = vcmp.eq.s32.totalorder %v43, %v1047
    %vm1056 = vcmp.eq.s32.totalorder %v44, %v1008
    %vm1057 = vcmp.eq.s32.totalorder %v44, %v1047
    %vm1058 = vcmp.eq.s32.totalorder %v45, %v1008
    %vm1059 = vcmp.eq.s32.totalorder %v45, %v1047
    %vm1060 = vcmp.eq.s32.totalorder %v46, %v1008
    %vm1061 = vcmp.eq.s32.totalorder %v46, %v1047
    %vm1062 = vcmp.eq.s32.totalorder %v47, %v1008
    %vm1063 = vcmp.eq.s32.totalorder %v47, %v1047
    %vm1064 = vcmp.eq.s32.totalorder %v48, %v1008
    %vm1065 = vcmp.eq.s32.totalorder %v48, %v1047
    %vm1066 = vcmp.eq.s32.totalorder %v49, %v1008
    %vm1067 = vcmp.eq.s32.totalorder %v49, %v1047
    %vm1068 = vcmp.eq.s32.totalorder %v50, %v1008
    %vm1069 = vcmp.eq.s32.totalorder %v50, %v1047
    %vm1070 = vcmp.eq.s32.totalorder %v51, %v1008
    %vm1071 = vcmp.eq.s32.totalorder %v51, %v1047
    %vm1072 = vcmp.eq.s32.totalorder %v52, %v1008
    %vm1073 = vcmp.eq.s32.totalorder %v52, %v1047
    %vm1074 = vcmp.eq.s32.totalorder %v53, %v1008
    %vm1075 = vcmp.eq.s32.totalorder %v53, %v1047
    %vm1076 = vcmp.eq.s32.totalorder %v54, %v1008
    %vm1077 = vcmp.eq.s32.totalorder %v54, %v1047
    %vm1078 = vcmp.eq.s32.totalorder %v55, %v1008
    %vm1079 = vcmp.eq.s32.totalorder %v55, %v1047
    %v1080 = vsel %vm1048, 1, 0
    %v1081 = vsel %vm1049, 1, 0
    %v1082 = vsel %vm1050, 1, 0
    %v1083 = vsel %vm1051, 1, 0
    %v1084 = vsel %vm1052, 1, 0
    %v1085 = vsel %vm1053, 1, 0
    %v1086 = vsel %vm1054, 1, 0
    %v1087 = vsel %vm1055, 1, 0
    %v1088 = vsel %vm1056, 1, 0
    %v1089 = vsel %vm1057, 1, 0
    %v1090 = vsel %vm1058, 1, 0
    %v1091 = vsel %vm1059, 1, 0
    %v1092 = vsel %vm1060, 1, 0
    %v1093 = vsel %vm1061, 1, 0
    %v1094 = vsel %vm1062, 1, 0
    %v1095 = vsel %vm1063, 1, 0
    %v1096 = vsel %vm1064, 1, 0
    %v1097 = vsel %vm1065, 1, 0
    %v1098 = vsel %vm1066, 1, 0
    %v1099 = vsel %vm1067, 1, 0
    %v1100 = vsel %vm1068, 1, 0
    %v1101 = vsel %vm1069, 1, 0
    %v1102 = vsel %vm1070, 1, 0
    %v1103 = vsel %vm1071, 1, 0
    %v1104 = vsel %vm1072, 1, 0
    %v1105 = vsel %vm1073, 1, 0
    %v1106 = vsel %vm1074, 1, 0
    %v1107 = vsel %vm1075, 1, 0
    %v1108 = vsel %vm1076, 1, 0
    %v1109 = vsel %vm1077, 1, 0
    %v1110 = vsel %vm1078, 1, 0
    %v1111 = vsel %vm1079, 1, 0
    %v1112 = vcvt.s32.f32 %v1080
    %v1113 = vcvt.s32.f32 %v1081
    %v1114 = vcvt.s32.f32 %v1082
    %v1115 = vcvt.s32.f32 %v1083
    %v1116 = vcvt.s32.f32 %v1084
    %v1117 = vcvt.s32.f32 %v1085
    %v1118 = vcvt.s32.f32 %v1086
    %v1119 = vcvt.s32.f32 %v1087
    %v1120 = vcvt.s32.f32 %v1088
    %v1121 = vcvt.s32.f32 %v1089
    %v1122 = vcvt.s32.f32 %v1090
    %v1123 = vcvt.s32.f32 %v1091
    %v1124 = vcvt.s32.f32 %v1092
    %v1125 = vcvt.s32.f32 %v1093
    %v1126 = vcvt.s32.f32 %v1094
    %v1127 = vcvt.s32.f32 %v1095
    %v1128 = vcvt.s32.f32 %v1096
    %v1129 = vcvt.s32.f32 %v1097
    %v1130 = vcvt.s32.f32 %v1098
    %v1131 = vcvt.s32.f32 %v1099
    %v1132 = vcvt.s32.f32 %v1100
    %v1133 = vcvt.s32.f32 %v1101
    %v1134 = vcvt.s32.f32 %v1102
    %v1135 = vcvt.s32.f32 %v1103
    %v1136 = vcvt.s32.f32 %v1104
    %v1137 = vcvt.s32.f32 %v1105
    %v1138 = vcvt.s32.f32 %v1106
    %v1139 = vcvt.s32.f32 %v1107
    %v1140 = vcvt.s32.f32 %v1108
    %v1141 = vcvt.s32.f32 %v1109
    %v1142 = vcvt.s32.f32 %v1110
    %v1143 = vcvt.s32.f32 %v1111
    %1144 = vmatprep.subr.mxu0 %v1113
    %1145 = vmatpush1.msra.mxu0 %v1112
    %1146 = vmatprep.subr.mxu0 %v1115
    %1147 = vmatpush1.msra.mxu0 %v1114
    %1148 = vmatprep.subr.mxu0 %v1117
    %1149 = vmatpush1.msra.mxu0 %v1116
    %1150 = vmatprep.subr.mxu0 %v1119
    %1151 = vmatpush1.msra.mxu0 %v1118
    %1152 = vmatprep.subr.mxu0 %v1121
    %1153 = vmatpush1.msra.mxu0 %v1120
    %1154 = vmatprep.subr.mxu0 %v1123
    %1155 = vmatpush1.msra.mxu0 %v1122
    %1156 = vmatprep.subr.mxu0 %v1125
    %1157 = vmatpush1.msra.mxu0 %v1124
    %1158 = vmatprep.subr.mxu0 %v1127
    %1159 = vmatpush1.msra.mxu0 %v1126
    %1160 = vmatprep.subr.mxu0 %v1129
    %1161 = vmatpush1.msra.mxu0 %v1128
    %1162 = vmatprep.subr.mxu0 %v1131
    %1163 = vmatpush1.msra.mxu0 %v1130
    %1164 = vmatprep.subr.mxu0 %v1133
    %1165 = vmatpush1.msra.mxu0 %v1132
    %1166 = vmatprep.subr.mxu0 %v1135
    %1167 = vmatpush1.msra.mxu0 %v1134
    %1168 = vmatprep.subr.mxu0 %v1137
    %1169 = vmatpush1.msra.mxu0 %v1136
    %1170 = vmatprep.subr.mxu0 %v1139
    %1171 = vmatpush1.msra.mxu0 %v1138
    %1172 = vmatprep.subr.mxu0 %v1141
    %1173 = vmatpush1.msra.mxu0 %v1140
    %1174 = vmatprep.subr.mxu0 %v1143
    %1175 = vmatpush1.msra.mxu0 %v1142
    %1176 = vmatprep.subr.mxu0 0.0
    %1177 = vmatpush1.msra.mxu0 0.0
    %1178 = vmatprep.subr.mxu0 0.0
    %1179 = vmatpush1.msra.mxu0 0.0
    %1180 = vmatprep.subr.mxu0 0.0
    %1181 = vmatpush1.msra.mxu0 0.0
    %1182 = vmatprep.subr.mxu0 0.0
    %1183 = vmatpush1.msra.mxu0 0.0
    %1184 = vmatprep.subr.mxu0 0.0
    %1185 = vmatpush1.msra.mxu0 0.0
    %1186 = vmatprep.subr.mxu0 0.0
    %1187 = vmatpush1.msra.mxu0 0.0
    %1188 = vmatprep.subr.mxu0 0.0
    %1189 = vmatpush1.msra.mxu0 0.0
    %1190 = vmatprep.subr.mxu0 0.0
    %1191 = vmatpush1.msra.mxu0 0.0
    %1192 = vmatprep.subr.mxu0 0.0
    %1193 = vmatpush1.msra.mxu0 0.0
    %1194 = vmatprep.subr.mxu0 0.0
    %1195 = vmatpush1.msra.mxu0 0.0
    %1196 = vmatprep.subr.mxu0 0.0
    %1197 = vmatpush1.msra.mxu0 0.0
    %1198 = vmatprep.subr.mxu0 0.0
    %1199 = vmatpush1.msra.mxu0 0.0
    %1200 = vmatprep.subr.mxu0 0.0
    %1201 = vmatpush1.msra.mxu0 0.0
    %1202 = vmatprep.subr.mxu0 0.0
    %1203 = vmatpush1.msra.mxu0 0.0
    %1204 = vmatprep.subr.mxu0 0.0
    %1205 = vmatpush1.msra.mxu0 0.0
    %1206 = vmatprep.subr.mxu0 0.0
    %1207 = vmatpush1.msra.mxu0 0.0
    %1208 = vmatprep.mubr.f32.mxu0 0.0
    %1209 = vmatmul.mubr.f32.gmra.mrb[0].mxu0 %v35
    %v1210 = vpop.f32.mrb[0].mxu0
    %v1211 = vadd.f32 0.0, %v1210
    %v1212 = vpop.f32.mrb[0].mxu0
    %v1213 = vadd.f32 0.0, %v1212
    %1214 = vdwg.mxu0
    %s1215 = scalar_lea.vmem [#allocation2], 16
    %1216 = vst [vmem:[%s1215] sm:$0xff] %v1211
    %1217 = vst [vmem:[%s1215 + $0x8] sm:$0xff] %v1213
    %v1218 = vadd.f32 %v1112, %v1113
    %1219 = vadd.xlane.f32.xlu0 %v1218
    %v1220 = vpop.xlane.xlu0 %1219
    %v1221 = vadd.f32 %v1114, %v1115
    %1222 = vadd.xlane.f32.xlu0 %v1221
    %v1223 = vpop.xlane.xlu0 %1222
    %v1224 = vadd.f32 %v1116, %v1117
    %1225 = vadd.xlane.f32.xlu0 %v1224
    %v1226 = vpop.xlane.xlu0 %1225
    %v1227 = vadd.f32 %v1118, %v1119
    %1228 = vadd.xlane.f32.xlu0 %v1227
    %v1229 = vpop.xlane.xlu0 %1228
    %v1230 = vadd.f32 %v1120, %v1121
    %1231 = vadd.xlane.f32.xlu0 %v1230
    %v1232 = vpop.xlane.xlu0 %1231
    %v1233 = vadd.f32 %v1122, %v1123
    %1234 = vadd.xlane.f32.xlu0 %v1233
    %v1235 = vpop.xlane.xlu0 %1234
    %v1236 = vadd.f32 %v1124, %v1125
    %1237 = vadd.xlane.f32.xlu0 %v1236
    %v1238 = vpop.xlane.xlu0 %1237
    %v1239 = vadd.f32 %v1126, %v1127
    %1240 = vadd.xlane.f32.xlu0 %v1239
    %v1241 = vpop.xlane.xlu0 %1240
    %v1242 = vadd.f32 %v1128, %v1129
    %1243 = vadd.xlane.f32.xlu0 %v1242
    %v1244 = vpop.xlane.xlu0 %1243
    %v1245 = vadd.f32 %v1130, %v1131
    %1246 = vadd.xlane.f32.xlu0 %v1245
    %v1247 = vpop.xlane.xlu0 %1246
    %v1248 = vadd.f32 %v1132, %v1133
    %1249 = vadd.xlane.f32.xlu0 %v1248
    %v1250 = vpop.xlane.xlu0 %1249
    %v1251 = vadd.f32 %v1134, %v1135
    %1252 = vadd.xlane.f32.xlu0 %v1251
    %v1253 = vpop.xlane.xlu0 %1252
    %v1254 = vadd.f32 %v1136, %v1137
    %1255 = vadd.xlane.f32.xlu0 %v1254
    %v1256 = vpop.xlane.xlu0 %1255
    %v1257 = vadd.f32 %v1138, %v1139
    %1258 = vadd.xlane.f32.xlu0 %v1257
    %v1259 = vpop.xlane.xlu0 %1258
    %v1260 = vadd.f32 %v1140, %v1141
    %1261 = vadd.xlane.f32.xlu0 %v1260
    %v1262 = vpop.xlane.xlu0 %1261
    %v1263 = vadd.f32 %v1142, %v1143
    %1264 = vadd.xlane.f32.xlu0 %v1263
    %v1265 = vpop.xlane.xlu0 %1264
    %v1266 = vadd.f32 %v669, %v1220
    %v1267 = vadd.f32 %v670, %v1223
    %v1268 = vadd.f32 %v671, %v1226
    %v1269 = vadd.f32 %v672, %v1229
    %v1270 = vadd.f32 %v673, %v1232
    %v1271 = vadd.f32 %v674, %v1235
    %v1272 = vadd.f32 %v675, %v1238
    %v1273 = vadd.f32 %v676, %v1241
    %v1274 = vadd.f32 %v677, %v1244
    %v1275 = vadd.f32 %v678, %v1247
    %v1276 = vadd.f32 %v679, %v1250
    %v1277 = vadd.f32 %v680, %v1253
    %v1278 = vadd.f32 %v681, %v1256
    %v1279 = vadd.f32 %v682, %v1259
    %v1280 = vadd.f32 %v683, %v1262
    %v1281 = vadd.f32 %v684, %v1265
    %v1282 = vsub.f32 %v1211, %v701
    %v1283 = vsub.f32 %v1213, %v702
    %v1284 = vmul.f32 %v1282, %v1282
    %v1285 = vmul.f32 %v1283, %v1283
    %v1286 = vadd.f32 %v1284, %v1285
    %1287 = vadd.xlane.f32.xlu0 %v1286
    %v1288 = vpop.xlane.xlu0 %1287
    %v1289 = vrot.slane %v1288, 4
    %v1290 = vadd.f32 %v1288, %v1289
    %v1291 = vrot.slane %v1290, 2
    %v1292 = vadd.f32 %v1290, %v1291
    %v1293 = vrot.slane %v1292, 1
    %v1294 = vadd.f32 %v1292, %v1293
    %s1295 = vtos %v1294
    %s1296 = sadd.f32 %s699, %s1295
    %vm1297 = vcmask 7168
    %1298 = vst.msk [vmem:[%s4] sm:$0xff] %vm1297, %v1266
    %1299 = vst.msk [vmem:[%s4 + $0x8] sm:$0xff] %vm1297, %v1267
    %1300 = vst.msk [vmem:[%s4 + $0x10] sm:$0xff] %vm1297, %v1268
    %1301 = vst.msk [vmem:[%s4 + $0x18] sm:$0xff] %vm1297, %v1269
    %1302 = vst.msk [vmem:[%s4 + $0x20] sm:$0xff] %vm1297, %v1270
    %1303 = vst.msk [vmem:[%s4 + $0x28] sm:$0xff] %vm1297, %v1271
    %1304 = vst.msk [vmem:[%s4 + $0x30] sm:$0xff] %vm1297, %v1272
    %1305 = vst.msk [vmem:[%s4 + $0x38] sm:$0xff] %vm1297, %v1273
    %1306 = vst.msk [vmem:[%s4 + $0x40] sm:$0xff] %vm1297, %v1274
    %1307 = vst.msk [vmem:[%s4 + $0x48] sm:$0xff] %vm1297, %v1275
    %1308 = vst.msk [vmem:[%s4 + $0x50] sm:$0xff] %vm1297, %v1276
    %1309 = vst.msk [vmem:[%s4 + $0x58] sm:$0xff] %vm1297, %v1277
    %1310 = vst.msk [vmem:[%s4 + $0x60] sm:$0xff] %vm1297, %v1278
    %1311 = vst.msk [vmem:[%s4 + $0x68] sm:$0xff] %vm1297, %v1279
    %1312 = vst.msk [vmem:[%s4 + $0x70] sm:$0xff] %vm1297, %v1280
    %1313 = vst.msk [vmem:[%s4 + $0x78] sm:$0xff] %vm1297, %v1281
    %v1314 = vstv %s1296
    %1315 = vst [vmem:[#allocation4] sm:$0x1] %v1314
    // Predicated region
    $region14: #{tpu_custom_call.1} parent=1 // pred_check
      _
    $region15: #{tpu_custom_call.1} parent=1 // pred_check_branch
      %1317 = sbr.rel (0) target = $region17
    $region16: #{tpu_custom_call.1} parent=1 // pred_region
      %s1319 = ssub.s32 512, 512
      %1320 = vsyncadd [#allocation3], %s1319
      %s1321 = sshll.u32 [#allocation2], 4
      %s1322 = int_to_ptr.vmem [resolvable:$true] %s1321
      %1327 = dma.vmem_to_hbm [thread:$0]  %s1322, 512, %s3, [#allocation3], 256, 256, 16
    $region17: #{tpu_custom_call.1} parent=1 // pred_fallthru
      _
    // Predicated region
    $region18: #{tpu_custom_call.1} parent=1 // pred_check
      _
    $region19: #{tpu_custom_call.1} parent=1 // pred_check_branch
      %1329 = sbr.rel (0) target = $region21
    $region20: #{tpu_custom_call.1} parent=1 // pred_region
      _
    $region21: #{tpu_custom_call.1} parent=1 // pred_fallthru
      _
    // Predicated region
    $region22: #{tpu_custom_call.1} parent=1 // pred_check
      _
    $region23: #{tpu_custom_call.1} parent=1 // pred_check_branch
      %1331 = sbr.rel (0) target = $region25
    $region24: #{tpu_custom_call.1} parent=1 // pred_region
      %s1333 = ssub.s32 16, 16
      %1334 = vsyncadd [#allocation5], %s1333
      %s1336 = sshll.u32 [#allocation4], 4
      %s1337 = int_to_ptr.vmem [resolvable:$true] %s1336
      %1339 = dma.vmem_to_hbm [thread:$0]  %s1337, 16, %s5, [#allocation5]
    $region25: #{tpu_custom_call.1} parent=1 // pred_fallthru
      _
    // Predicated region
    $region26: #{tpu_custom_call.1} parent=1 // pred_check
      _
    $region27: #{tpu_custom_call.1} parent=1 // pred_check_branch
      %1341 = sbr.rel (0) target = $region29
    $region28: #{tpu_custom_call.1} parent=1 // pred_region
      %1342 = dma.done [#allocation3], 512
    $region29: #{tpu_custom_call.1} parent=1 // pred_fallthru
      _
    // Predicated region
    $region30: #{tpu_custom_call.1} parent=1 // pred_check
      _
    $region31: #{tpu_custom_call.1} parent=1 // pred_check_branch
      %1344 = sbr.rel (0) target = $region33
    $region32: #{tpu_custom_call.1} parent=1 // pred_region
      _
    $region33: #{tpu_custom_call.1} parent=1 // pred_fallthru
      _
    // Predicated region
    $region34: #{tpu_custom_call.1} parent=1 // pred_check
      _
    $region35: #{tpu_custom_call.1} parent=1 // pred_check_branch
      %1346 = sbr.rel (0) target = $region37
    $region36: #{tpu_custom_call.1} parent=1 // pred_region
      %1347 = dma.done [#allocation5], 16
    $region37: #{tpu_custom_call.1} parent=1 // pred_fallthru
      _
    %1348 = vsyncpa [#allocation3], 1
    %1349 = vsyncpa [#allocation5], 1

</llo_original>
